<compile_context>
chip_gen: v5e
topology: v5e:2x2
jax: 0.10.0
libtpu: 0.0.40
codegen_flags: <defaults>
</compile_context>

<pallas_src>
import functools

import jax
import jax.numpy as jnp
from jax.experimental import pallas as pl
from jax.experimental.pallas import tpu as pltpu

STRUCT_FEAT_DIM = 4  # degree, diag(A^2), diag(A^3), diag(A^4)


def _round_up(x, m):
    return ((x + m - 1) // m) * m


# ----------------------------------------------------------------------------
# Single fused kernel: one grid step == one graph (one batch element).
# ----------------------------------------------------------------------------
def _fused_disc_kernel(*refs, n_layers, has_proj, n0, use_global, attrib_dim):
    """refs layout:
         [0]              attrib_ref  (1, n0, max(attrib_dim,1))
         [1]              adj_ref     (1, Np, Np)  bf16 (padded, global node at n0)
         [2 : 2+10*L]     per layer: w1,b1,w2,b2,wt,bt,wp,bp,wpt,bpt
         [2+10*L : -1]    readout: wr1, br1, wr2_row(1,H), br2
         [-1]             o_ref (1, 1, 1)
    """
    attrib_ref = refs[0]
    adj_ref = refs[1]
    wrefs = refs[2:2 + 10 * n_layers]
    wr1_ref, br1_ref, wr2_ref, br2_ref = refs[2 + 10 * n_layers:2 + 10 * n_layers + 4]
    o_ref = refs[-1]

    a_pad = adj_ref[0]                                   # (Np, Np) bf16
    np_ = a_pad.shape[0]
    a_f32 = a_pad.astype(jnp.float32)                    # used by the per-layer A@x

    # ---- structural features on the ORIGINAL n0 x n0 graph (diag-only) ----
    # Only one matmul (A^2); diagonals via elementwise rowsums (A symmetric).
    a0f = a_f32[:n0, :n0]
    a0b = a0f.astype(jnp.bfloat16)                       # 0/1 -> exact in bf16
    a2 = jnp.dot(a0b, a0b, preferred_element_type=jnp.float32)
    deg = jnp.sum(a0f, axis=-1, keepdims=True)
    c2 = jnp.sum(a0f * a0f, axis=-1, keepdims=True)      # diag(A^2)
    c3 = jnp.sum(a2 * a0f, axis=-1, keepdims=True)       # diag(A^3)
    c4 = jnp.sum(a2 * a2, axis=-1, keepdims=True)        # diag(A^4)
    feats = jnp.concatenate([deg, c2, c3, c4], axis=-1) * (1.0 / float(n0))

    # ---- build padded input node features x0 (Np, C0) ----
    if attrib_dim > 0:
        attrib = attrib_ref[0].astype(jnp.float32)       # (n0, attrib_dim)
        base = jnp.concatenate([attrib, feats], axis=-1)
    else:
        base = feats
    pad_rows = np_ - n0
    if pad_rows > 0:
        base = jnp.concatenate(
            [base, jnp.zeros((pad_rows, base.shape[-1]), jnp.float32)], axis=0)
    row_idx = jax.lax.broadcasted_iota(jnp.int32, (np_, 1), 0)
    if use_global:
        flag = (row_idx == n0).astype(jnp.float32)       # global-node indicator col
        x = jnp.concatenate([base, flag], axis=-1)
        n_real = n0 + 1
    else:
        x = base
        n_real = n0
    node_mask = (row_idx < n_real).astype(jnp.float32)   # (Np, 1)
    need_mask = np_ > n_real

    # ---- GINSkip layers (all VMEM/vreg resident) ----
    zis = []
    for l in range(n_layers):
        w1, b1, w2, b2, wt, bt, wp, bp, wpt, bpt = wrefs[10 * l:10 * (l + 1)]

        # DenseGINConv aggregation (eps=0, add_loop): (A + I) x
        agg = x + jnp.dot(a_f32, x, preferred_element_type=jnp.float32)

        # GIN MLP: Linear -> ReLU -> Linear
        h = jnp.maximum(
            jnp.dot(agg, w1[...], preferred_element_type=jnp.float32) + b1[...], 0.0)
        gin = jnp.dot(h, w2[...], preferred_element_type=jnp.float32) + b2[...]

        # LinearTransmissionLayer: graph sum-pool -> Linear -> broadcast
        xsum = jnp.sum(x, axis=0, keepdims=True)         # padded rows are zero
        trans = jnp.dot(xsum, wt[...], preferred_element_type=jnp.float32) + bt[...]
        out = gin + trans

        # NodeFeatNorm 'layer' (no affine), eps = 1e-5
        mu = jnp.mean(out, axis=-1, keepdims=True)
        var = jnp.mean((out - mu) ** 2, axis=-1, keepdims=True)
        normed = (out - mu) * jax.lax.rsqrt(var + 1e-5)

        # skip: identity or projection DenseGINConv
        if has_proj[l]:
            skip = (jnp.dot(agg, wp[...], preferred_element_type=jnp.float32) + bp[...]
                    + jnp.dot(xsum, wpt[...], preferred_element_type=jnp.float32)
                    + bpt[...])
        else:
            skip = x

        z = normed + skip
        if need_mask:
            z = z * node_mask                            # keep padded rows exactly 0
        zis.append(z)
        x = z

    zfinal = jnp.concatenate(zis, axis=-1) if n_layers > 1 else zis[0]

    # ---- readout: Linear -> ReLU, masked sum over nodes, final dot on the VPU ----
    hr = jnp.maximum(
        jnp.dot(zfinal, wr1_ref[...], preferred_element_type=jnp.float32)
        + br1_ref[...], 0.0)
    if need_mask:
        hr = hr * node_mask
    aggr = jnp.sum(hr, axis=0, keepdims=True)            # (1, H)  'sum' readout
    score = jnp.sum(aggr * wr2_ref[...], axis=-1, keepdims=True) + br2_ref[...]
    o_ref[0] = score.astype(o_ref.dtype)


# ----------------------------------------------------------------------------
# Discriminator (architecture='GIN', swish=False->ReLU, spectral_norm=None,
# dropout=None, precat_raw=False, readout_agg='sum', add_global_node=True,
# pac=1, gcn_norm='layer' no affine)
# ----------------------------------------------------------------------------
class Discriminator:
    def __init__(self, key, node_attrib_dim, conv_channels,
                 gin_hidden=32, readout_hidden=64, add_global_node=True):
        self.node_attrib_dim = node_attrib_dim
        self.add_global_node = add_global_node
        self.conv_channels = tuple(conv_channels)
        in_channels = node_attrib_dim + STRUCT_FEAT_DIM + int(add_global_node)

        def linear(k, cin, cout):
            kw, _ = jax.random.split(k)
            scale = (2.0 / (cin + cout)) ** 0.5
            w = scale * jax.random.normal(kw, (cin, cout), jnp.float32)  # [in, out]
            b = jnp.zeros((1, cout), jnp.float32)
            return w, b

        keys = jax.random.split(key, 6 * len(self.conv_channels) + 2)
        ki = iter(range(len(keys)))

        self.layers, self.has_proj = [], []
        cin = in_channels
        for cout in self.conv_channels:
            w1, b1 = linear(keys[next(ki)], cin, gin_hidden)
            w2, b2 = linear(keys[next(ki)], gin_hidden, cout)
            wt, bt = linear(keys[next(ki)], cin, cout)       # transmission
            wp, bp = linear(keys[next(ki)], cin, cout)       # proj GIN linear
            wpt, bpt = linear(keys[next(ki)], cin, cout)     # proj transmission
            _ = keys[next(ki)]
            self.layers.append(dict(w1=w1, b1=b1, w2=w2, b2=b2, wt=wt, bt=bt,
                                    wp=wp, bp=bp, wpt=wpt, bpt=bpt))
            self.has_proj.append(cin != cout)
            cin = cout

        readout_feats = sum(self.conv_channels)              # precat_raw=False
        wr1, br1 = linear(keys[next(ki)], readout_feats, readout_hidden)
        wr2, br2 = linear(keys[next(ki)], readout_hidden, 1)
        self.readout_params = dict(wr1=wr1, br1=br1, wr2=wr2, br2=br2)

    def __call__(self, attrib, adj):
        if adj.ndim == 2:
            adj = adj[None]
        if attrib is not None and attrib.ndim == 2:
            attrib = attrib[None]

        B, N0, _ = adj.shape
        n_real = N0 + int(self.add_global_node)
        Np = _round_up(n_real, 8)                            # sublane-aligned nodes

        # Build padded adjacency (+ global node row/col) in JAX, ship as bf16.
        adj_pad = jnp.zeros((B, Np, Np), jnp.float32)
        adj_pad = adj_pad.at[:, :N0, :N0].set(adj.astype(jnp.float32))
        if self.add_global_node:
            adj_pad = adj_pad.at[:, N0, :N0].set(1.0)
            adj_pad = adj_pad.at[:, :N0, N0].set(1.0)
        adj_pad = adj_pad.astype(jnp.bfloat16)

        if self.node_attrib_dim > 0:
            attrib_in = attrib.astype(jnp.float32)
        else:
            # TODO(synk): node_attrib_dim == 0 path uses a dummy column the
            # kernel never reads (attrib_dim static flag skips it).
            attrib_in = jnp.zeros((B, N0, 1), jnp.float32)

        L = len(self.conv_channels)
        weight_args = []
        for p in self.layers:
            weight_args += [p["w1"], p["b1"], p["w2"], p["b2"], p["wt"], p["bt"],
                            p["wp"], p["bp"], p["wpt"], p["bpt"]]
        rp = self.readout_params
        ro_args = [rp["wr1"], rp["br1"], rp["wr2"].reshape(1, -1), rp["br2"]]

        def wspec(arr):
            nd = arr.ndim
            return pl.BlockSpec(arr.shape, lambda b, _nd=nd: (0,) * _nd)

        args = [attrib_in, adj_pad] + weight_args + ro_args
        in_specs = ([pl.BlockSpec((1, attrib_in.shape[1], attrib_in.shape[2]),
                                  lambda b: (b, 0, 0)),
                     pl.BlockSpec((1, Np, Np), lambda b: (b, 0, 0))]
                    + [wspec(a) for a in weight_args + ro_args])

        kernel = functools.partial(
            _fused_disc_kernel, n_layers=L, has_proj=tuple(self.has_proj),
            n0=N0, use_global=self.add_global_node,
            attrib_dim=self.node_attrib_dim)

        out = pl.pallas_call(
            kernel,
            out_shape=jax.ShapeDtypeStruct((B, 1, 1), jnp.float32),
            grid=(B,),
            in_specs=in_specs,
            out_specs=pl.BlockSpec((1, 1, 1), lambda b: (b, 0, 0)),
            compiler_params=pltpu.CompilerParams(
                dimension_semantics=("parallel",)),   # batch shards across TCs on v7x
        )(*args)
        return out[:, 0, :]                                   # (B, 1) score


if __name__ == "__main__":
    key = jax.random.PRNGKey(0)
    B, N, attrib_dim = 2, 16, 4
    conv_channels = (16, 16)

    k_attr, k_adj, k_par = jax.random.split(key, 3)
    attrib = jax.random.normal(k_attr, (B, N, attrib_dim), jnp.float32)
    upper = jnp.triu((jax.random.uniform(k_adj, (B, N, N)) < 0.3).astype(jnp.float32), 1)
    adj = upper + jnp.transpose(upper, (0, 2, 1))             # symmetric, zero diag

    disc = Discriminator(k_par, attrib_dim, conv_channels)
    out = disc(attrib, adj)
    out = jax.block_until_ready(out)
    assert out.shape == (B, 1) and bool(jnp.isfinite(out).all())
    print("KERNEL_OK")
</pallas_src>

<mosaic_0001>
module attributes {stable_mosaic.version = 11 : i64} {
  func.func @_fused_disc_kernel(%arg0: i32, %arg1: memref<1x16x4xf32, #tpu.memory_space<vmem>>, %arg2: memref<1x24x24xbf16, #tpu.memory_space<vmem>>, %arg3: memref<9x32xf32, #tpu.memory_space<vmem>>, %arg4: memref<1x32xf32, #tpu.memory_space<vmem>>, %arg5: memref<32x16xf32, #tpu.memory_space<vmem>>, %arg6: memref<1x16xf32, #tpu.memory_space<vmem>>, %arg7: memref<9x16xf32, #tpu.memory_space<vmem>>, %arg8: memref<1x16xf32, #tpu.memory_space<vmem>>, %arg9: memref<9x16xf32, #tpu.memory_space<vmem>>, %arg10: memref<1x16xf32, #tpu.memory_space<vmem>>, %arg11: memref<9x16xf32, #tpu.memory_space<vmem>>, %arg12: memref<1x16xf32, #tpu.memory_space<vmem>>, %arg13: memref<16x32xf32, #tpu.memory_space<vmem>>, %arg14: memref<1x32xf32, #tpu.memory_space<vmem>>, %arg15: memref<32x16xf32, #tpu.memory_space<vmem>>, %arg16: memref<1x16xf32, #tpu.memory_space<vmem>>, %arg17: memref<16x16xf32, #tpu.memory_space<vmem>>, %arg18: memref<1x16xf32, #tpu.memory_space<vmem>>, %arg19: memref<16x16xf32, #tpu.memory_space<vmem>>, %arg20: memref<1x16xf32, #tpu.memory_space<vmem>>, %arg21: memref<16x16xf32, #tpu.memory_space<vmem>>, %arg22: memref<1x16xf32, #tpu.memory_space<vmem>>, %arg23: memref<32x64xf32, #tpu.memory_space<vmem>>, %arg24: memref<1x64xf32, #tpu.memory_space<vmem>>, %arg25: memref<1x64xf32, #tpu.memory_space<vmem>>, %arg26: memref<1x1xf32, #tpu.memory_space<vmem>>, %arg27: memref<1x1x1xf32, #tpu.memory_space<vmem>>) attributes {dimension_semantics = [#tpu.dimension_semantics<parallel>], iteration_bounds = array<i64: 2>, scalar_prefetch = 0 : i64, scratch_operands = 0 : i64, tpu.core_type = #tpu.core_type<tc>, window_params = [{transform_indices = @transform_0, window_bounds = array<i64: 1, 16, 4>}, {transform_indices = @transform_1, window_bounds = array<i64: 1, 24, 24>}, {pipeline_mode = #tpu.pipeline_mode<synchronous>, transform_indices = @transform_2, window_bounds = array<i64: 9, 32>}, {pipeline_mode = #tpu.pipeline_mode<synchronous>, transform_indices = @transform_3, window_bounds = array<i64: 1, 32>}, {pipeline_mode = #tpu.pipeline_mode<synchronous>, transform_indices = @transform_4, window_bounds = array<i64: 32, 16>}, {pipeline_mode = #tpu.pipeline_mode<synchronous>, transform_indices = @transform_5, window_bounds = array<i64: 1, 16>}, {pipeline_mode = #tpu.pipeline_mode<synchronous>, transform_indices = @transform_6, window_bounds = array<i64: 9, 16>}, {pipeline_mode = #tpu.pipeline_mode<synchronous>, transform_indices = @transform_7, window_bounds = array<i64: 1, 16>}, {pipeline_mode = #tpu.pipeline_mode<synchronous>, transform_indices = @transform_8, window_bounds = array<i64: 9, 16>}, {pipeline_mode = #tpu.pipeline_mode<synchronous>, transform_indices = @transform_9, window_bounds = array<i64: 1, 16>}, {pipeline_mode = #tpu.pipeline_mode<synchronous>, transform_indices = @transform_10, window_bounds = array<i64: 9, 16>}, {pipeline_mode = #tpu.pipeline_mode<synchronous>, transform_indices = @transform_11, window_bounds = array<i64: 1, 16>}, {pipeline_mode = #tpu.pipeline_mode<synchronous>, transform_indices = @transform_12, window_bounds = array<i64: 16, 32>}, {pipeline_mode = #tpu.pipeline_mode<synchronous>, transform_indices = @transform_13, window_bounds = array<i64: 1, 32>}, {pipeline_mode = #tpu.pipeline_mode<synchronous>, transform_indices = @transform_14, window_bounds = array<i64: 32, 16>}, {pipeline_mode = #tpu.pipeline_mode<synchronous>, transform_indices = @transform_15, window_bounds = array<i64: 1, 16>}, {pipeline_mode = #tpu.pipeline_mode<synchronous>, transform_indices = @transform_16, window_bounds = array<i64: 16, 16>}, {pipeline_mode = #tpu.pipeline_mode<synchronous>, transform_indices = @transform_17, window_bounds = array<i64: 1, 16>}, {pipeline_mode = #tpu.pipeline_mode<synchronous>, transform_indices = @transform_18, window_bounds = array<i64: 16, 16>}, {pipeline_mode = #tpu.pipeline_mode<synchronous>, transform_indices = @transform_19, window_bounds = array<i64: 1, 16>}, {pipeline_mode = #tpu.pipeline_mode<synchronous>, transform_indices = @transform_20, window_bounds = array<i64: 16, 16>}, {pipeline_mode = #tpu.pipeline_mode<synchronous>, transform_indices = @transform_21, window_bounds = array<i64: 1, 16>}, {pipeline_mode = #tpu.pipeline_mode<synchronous>, transform_indices = @transform_22, window_bounds = array<i64: 32, 64>}, {pipeline_mode = #tpu.pipeline_mode<synchronous>, transform_indices = @transform_23, window_bounds = array<i64: 1, 64>}, {pipeline_mode = #tpu.pipeline_mode<synchronous>, transform_indices = @transform_24, window_bounds = array<i64: 1, 64>}, {pipeline_mode = #tpu.pipeline_mode<synchronous>, transform_indices = @transform_25, window_bounds = array<i64: 1, 1>}, {transform_indices = @transform_26, window_bounds = array<i64: 1, 1, 1>}]} {
    %c0 = arith.constant 0 : index
    %c0_0 = arith.constant 0 : index
    %c0_1 = arith.constant 0 : index
    %0 = vector.load %arg2[%c0, %c0_0, %c0_1] : memref<1x24x24xbf16, #tpu.memory_space<vmem>>, vector<1x24x24xbf16>
    %1 = vector.shape_cast %0 : vector<1x24x24xbf16> to vector<24x24xbf16>
    %2 = arith.extf %1 : vector<24x24xbf16> to vector<24x24xf32>
    %3 = vector.extract_strided_slice %2 {offsets = [0, 0], sizes = [16, 16], strides = [1, 1]} : vector<24x24xf32> to vector<16x16xf32>
    %4 = arith.truncf %3 : vector<16x16xf32> to vector<16x16xbf16>
    %cst = arith.constant dense<0.000000e+00> : vector<16x16xf32>
    %5 = tpu.matmul %4, %4, %cst {dimension_numbers = #tpu.dot_dimension_numbers<[1], [0], [0], [1], [0, 0, 1, 1], [], []>} : vector<16x16xbf16>, vector<16x16xbf16>, vector<16x16xf32> -> vector<16x16xf32>
    %cst_2 = arith.constant dense<0.000000e+00> : vector<16xf32>
    %6 = vector.multi_reduction <add>, %3, %cst_2 [1] : vector<16x16xf32> to vector<16xf32>
    %7 = vector.shape_cast %6 : vector<16xf32> to vector<16x1xf32>
    %8 = arith.mulf %3, %3 : vector<16x16xf32>
    %cst_3 = arith.constant dense<0.000000e+00> : vector<16xf32>
    %9 = vector.multi_reduction <add>, %8, %cst_3 [1] : vector<16x16xf32> to vector<16xf32>
    %10 = vector.shape_cast %9 : vector<16xf32> to vector<16x1xf32>
    %11 = arith.mulf %5, %3 : vector<16x16xf32>
    %cst_4 = arith.constant dense<0.000000e+00> : vector<16xf32>
    %12 = vector.multi_reduction <add>, %11, %cst_4 [1] : vector<16x16xf32> to vector<16xf32>
    %13 = vector.shape_cast %12 : vector<16xf32> to vector<16x1xf32>
    %14 = arith.mulf %5, %5 : vector<16x16xf32>
    %cst_5 = arith.constant dense<0.000000e+00> : vector<16xf32>
    %15 = vector.multi_reduction <add>, %14, %cst_5 [1] : vector<16x16xf32> to vector<16xf32>
    %16 = vector.shape_cast %15 : vector<16xf32> to vector<16x1xf32>
    %17 = tpu.concatenate %7, %10, %13, %16 in 1 : vector<16x1xf32>, vector<16x1xf32>, vector<16x1xf32>, vector<16x1xf32> -> vector<16x4xf32>
    %cst_6 = arith.constant 6.250000e-02 : f32
    %18 = vector.broadcast %cst_6 : f32 to vector<16x4xf32>
    %19 = arith.mulf %17, %18 : vector<16x4xf32>
    %c0_7 = arith.constant 0 : index
    %c0_8 = arith.constant 0 : index
    %c0_9 = arith.constant 0 : index
    %20 = vector.load %arg1[%c0_7, %c0_8, %c0_9] : memref<1x16x4xf32, #tpu.memory_space<vmem>>, vector<1x16x4xf32>
    %21 = vector.shape_cast %20 : vector<1x16x4xf32> to vector<16x4xf32>
    %22 = tpu.concatenate %21, %19 in 1 : vector<16x4xf32>, vector<16x4xf32> -> vector<16x8xf32>
    %cst_10 = arith.constant 0.000000e+00 : f32
    %23 = vector.broadcast %cst_10 : f32 to vector<8x8xf32>
    %24 = tpu.concatenate %22, %23 in 0 : vector<16x8xf32>, vector<8x8xf32> -> vector<24x8xf32>
    %25 = tpu.iota {dimensions = array<i32: 0>} : vector<24x1xi32>
    %c16_i32 = arith.constant 16 : i32
    %26 = vector.broadcast %c16_i32 : i32 to vector<24x1xi32>
    %27 = arith.cmpi eq, %25, %26 : vector<24x1xi32>
    %28 = arith.extui %27 : vector<24x1xi1> to vector<24x1xi32>
    %29 = arith.sitofp %28 : vector<24x1xi32> to vector<24x1xf32>
    %30 = tpu.concatenate %24, %29 in 1 : vector<24x8xf32>, vector<24x1xf32> -> vector<24x9xf32>
    %c17_i32 = arith.constant 17 : i32
    %31 = vector.broadcast %c17_i32 : i32 to vector<24x1xi32>
    %32 = arith.cmpi slt, %25, %31 : vector<24x1xi32>
    %33 = arith.extui %32 : vector<24x1xi1> to vector<24x1xi32>
    %34 = arith.sitofp %33 : vector<24x1xi32> to vector<24x1xf32>
    %cst_11 = arith.constant dense<0.000000e+00> : vector<24x9xf32>
    %35 = tpu.matmul %2, %30, %cst_11 {dimension_numbers = #tpu.dot_dimension_numbers<[1], [0], [0], [1], [0, 0, 1, 1], [], []>} : vector<24x24xf32>, vector<24x9xf32>, vector<24x9xf32> -> vector<24x9xf32>
    %36 = arith.addf %30, %35 : vector<24x9xf32>
    %c0_12 = arith.constant 0 : index
    %c0_13 = arith.constant 0 : index
    %37 = vector.load %arg3[%c0_12, %c0_13] : memref<9x32xf32, #tpu.memory_space<vmem>>, vector<9x32xf32>
    %cst_14 = arith.constant dense<0.000000e+00> : vector<24x32xf32>
    %38 = tpu.matmul %36, %37, %cst_14 {dimension_numbers = #tpu.dot_dimension_numbers<[1], [0], [0], [1], [0, 0, 1, 1], [], []>} : vector<24x9xf32>, vector<9x32xf32>, vector<24x32xf32> -> vector<24x32xf32>
    %c0_15 = arith.constant 0 : index
    %c0_16 = arith.constant 0 : index
    %39 = vector.load %arg4[%c0_15, %c0_16] : memref<1x32xf32, #tpu.memory_space<vmem>>, vector<1x32xf32>
    %40 = vector.broadcast %39 : vector<1x32xf32> to vector<24x32xf32>
    %41 = arith.addf %38, %40 : vector<24x32xf32>
    %cst_17 = arith.constant 0.000000e+00 : f32
    %42 = vector.broadcast %cst_17 : f32 to vector<24x32xf32>
    %43 = arith.maximumf %41, %42 : vector<24x32xf32>
    %c0_18 = arith.constant 0 : index
    %c0_19 = arith.constant 0 : index
    %44 = vector.load %arg5[%c0_18, %c0_19] : memref<32x16xf32, #tpu.memory_space<vmem>>, vector<32x16xf32>
    %cst_20 = arith.constant dense<0.000000e+00> : vector<24x16xf32>
    %45 = tpu.matmul %43, %44, %cst_20 {dimension_numbers = #tpu.dot_dimension_numbers<[1], [0], [0], [1], [0, 0, 1, 1], [], []>} : vector<24x32xf32>, vector<32x16xf32>, vector<24x16xf32> -> vector<24x16xf32>
    %c0_21 = arith.constant 0 : index
    %c0_22 = arith.constant 0 : index
    %46 = vector.load %arg6[%c0_21, %c0_22] : memref<1x16xf32, #tpu.memory_space<vmem>>, vector<1x16xf32>
    %47 = vector.broadcast %46 : vector<1x16xf32> to vector<24x16xf32>
    %48 = arith.addf %45, %47 : vector<24x16xf32>
    %cst_23 = arith.constant dense<0.000000e+00> : vector<9xf32>
    %49 = vector.multi_reduction <add>, %30, %cst_23 [0] : vector<24x9xf32> to vector<9xf32>
    %50 = vector.shape_cast %49 : vector<9xf32> to vector<1x9xf32>
    %c0_24 = arith.constant 0 : index
    %c0_25 = arith.constant 0 : index
    %51 = vector.load %arg7[%c0_24, %c0_25] : memref<9x16xf32, #tpu.memory_space<vmem>>, vector<9x16xf32>
    %cst_26 = arith.constant dense<0.000000e+00> : vector<1x16xf32>
    %52 = tpu.matmul %50, %51, %cst_26 {dimension_numbers = #tpu.dot_dimension_numbers<[1], [0], [0], [1], [0, 0, 1, 1], [], []>} : vector<1x9xf32>, vector<9x16xf32>, vector<1x16xf32> -> vector<1x16xf32>
    %c0_27 = arith.constant 0 : index
    %c0_28 = arith.constant 0 : index
    %53 = vector.load %arg8[%c0_27, %c0_28] : memref<1x16xf32, #tpu.memory_space<vmem>>, vector<1x16xf32>
    %54 = arith.addf %52, %53 : vector<1x16xf32>
    %55 = vector.broadcast %54 : vector<1x16xf32> to vector<24x16xf32>
    %56 = arith.addf %48, %55 : vector<24x16xf32>
    %cst_29 = arith.constant dense<0.000000e+00> : vector<24xf32>
    %57 = vector.multi_reduction <add>, %56, %cst_29 [1] : vector<24x16xf32> to vector<24xf32>
    %58 = vector.shape_cast %57 : vector<24xf32> to vector<24x1xf32>
    %cst_30 = arith.constant 1.600000e+01 : f32
    %59 = vector.broadcast %cst_30 : f32 to vector<24x1xf32>
    %60 = arith.divf %58, %59 : vector<24x1xf32>
    %61 = vector.broadcast %60 : vector<24x1xf32> to vector<24x16xf32>
    %62 = arith.subf %56, %61 : vector<24x16xf32>
    %63 = arith.mulf %62, %62 : vector<24x16xf32>
    %cst_31 = arith.constant dense<0.000000e+00> : vector<24xf32>
    %64 = vector.multi_reduction <add>, %63, %cst_31 [1] : vector<24x16xf32> to vector<24xf32>
    %65 = vector.shape_cast %64 : vector<24xf32> to vector<24x1xf32>
    %cst_32 = arith.constant 1.600000e+01 : f32
    %66 = vector.broadcast %cst_32 : f32 to vector<24x1xf32>
    %67 = arith.divf %65, %66 : vector<24x1xf32>
    %68 = vector.broadcast %60 : vector<24x1xf32> to vector<24x16xf32>
    %69 = arith.subf %56, %68 : vector<24x16xf32>
    %cst_33 = arith.constant 9.99999974E-6 : f32
    %70 = vector.broadcast %cst_33 : f32 to vector<24x1xf32>
    %71 = arith.addf %67, %70 : vector<24x1xf32>
    %72 = math.rsqrt %71 : vector<24x1xf32>
    %73 = vector.broadcast %72 : vector<24x1xf32> to vector<24x16xf32>
    %74 = arith.mulf %69, %73 : vector<24x16xf32>
    %c0_34 = arith.constant 0 : index
    %c0_35 = arith.constant 0 : index
    %75 = vector.load %arg9[%c0_34, %c0_35] : memref<9x16xf32, #tpu.memory_space<vmem>>, vector<9x16xf32>
    %cst_36 = arith.constant dense<0.000000e+00> : vector<24x16xf32>
    %76 = tpu.matmul %36, %75, %cst_36 {dimension_numbers = #tpu.dot_dimension_numbers<[1], [0], [0], [1], [0, 0, 1, 1], [], []>} : vector<24x9xf32>, vector<9x16xf32>, vector<24x16xf32> -> vector<24x16xf32>
    %c0_37 = arith.constant 0 : index
    %c0_38 = arith.constant 0 : index
    %77 = vector.load %arg10[%c0_37, %c0_38] : memref<1x16xf32, #tpu.memory_space<vmem>>, vector<1x16xf32>
    %78 = vector.broadcast %77 : vector<1x16xf32> to vector<24x16xf32>
    %79 = arith.addf %76, %78 : vector<24x16xf32>
    %c0_39 = arith.constant 0 : index
    %c0_40 = arith.constant 0 : index
    %80 = vector.load %arg11[%c0_39, %c0_40] : memref<9x16xf32, #tpu.memory_space<vmem>>, vector<9x16xf32>
    %cst_41 = arith.constant dense<0.000000e+00> : vector<1x16xf32>
    %81 = tpu.matmul %50, %80, %cst_41 {dimension_numbers = #tpu.dot_dimension_numbers<[1], [0], [0], [1], [0, 0, 1, 1], [], []>} : vector<1x9xf32>, vector<9x16xf32>, vector<1x16xf32> -> vector<1x16xf32>
    %82 = vector.broadcast %81 : vector<1x16xf32> to vector<24x16xf32>
    %83 = arith.addf %79, %82 : vector<24x16xf32>
    %c0_42 = arith.constant 0 : index
    %c0_43 = arith.constant 0 : index
    %84 = vector.load %arg12[%c0_42, %c0_43] : memref<1x16xf32, #tpu.memory_space<vmem>>, vector<1x16xf32>
    %85 = vector.broadcast %84 : vector<1x16xf32> to vector<24x16xf32>
    %86 = arith.addf %83, %85 : vector<24x16xf32>
    %87 = arith.addf %74, %86 : vector<24x16xf32>
    %88 = vector.broadcast %34 : vector<24x1xf32> to vector<24x16xf32>
    %89 = arith.mulf %87, %88 : vector<24x16xf32>
    %cst_44 = arith.constant dense<0.000000e+00> : vector<24x16xf32>
    %90 = tpu.matmul %2, %89, %cst_44 {dimension_numbers = #tpu.dot_dimension_numbers<[1], [0], [0], [1], [0, 0, 1, 1], [], []>} : vector<24x24xf32>, vector<24x16xf32>, vector<24x16xf32> -> vector<24x16xf32>
    %91 = arith.addf %89, %90 : vector<24x16xf32>
    %c0_45 = arith.constant 0 : index
    %c0_46 = arith.constant 0 : index
    %92 = vector.load %arg13[%c0_45, %c0_46] : memref<16x32xf32, #tpu.memory_space<vmem>>, vector<16x32xf32>
    %cst_47 = arith.constant dense<0.000000e+00> : vector<24x32xf32>
    %93 = tpu.matmul %91, %92, %cst_47 {dimension_numbers = #tpu.dot_dimension_numbers<[1], [0], [0], [1], [0, 0, 1, 1], [], []>} : vector<24x16xf32>, vector<16x32xf32>, vector<24x32xf32> -> vector<24x32xf32>
    %c0_48 = arith.constant 0 : index
    %c0_49 = arith.constant 0 : index
    %94 = vector.load %arg14[%c0_48, %c0_49] : memref<1x32xf32, #tpu.memory_space<vmem>>, vector<1x32xf32>
    %95 = vector.broadcast %94 : vector<1x32xf32> to vector<24x32xf32>
    %96 = arith.addf %93, %95 : vector<24x32xf32>
    %cst_50 = arith.constant 0.000000e+00 : f32
    %97 = vector.broadcast %cst_50 : f32 to vector<24x32xf32>
    %98 = arith.maximumf %96, %97 : vector<24x32xf32>
    %c0_51 = arith.constant 0 : index
    %c0_52 = arith.constant 0 : index
    %99 = vector.load %arg15[%c0_51, %c0_52] : memref<32x16xf32, #tpu.memory_space<vmem>>, vector<32x16xf32>
    %cst_53 = arith.constant dense<0.000000e+00> : vector<24x16xf32>
    %100 = tpu.matmul %98, %99, %cst_53 {dimension_numbers = #tpu.dot_dimension_numbers<[1], [0], [0], [1], [0, 0, 1, 1], [], []>} : vector<24x32xf32>, vector<32x16xf32>, vector<24x16xf32> -> vector<24x16xf32>
    %c0_54 = arith.constant 0 : index
    %c0_55 = arith.constant 0 : index
    %101 = vector.load %arg16[%c0_54, %c0_55] : memref<1x16xf32, #tpu.memory_space<vmem>>, vector<1x16xf32>
    %102 = vector.broadcast %101 : vector<1x16xf32> to vector<24x16xf32>
    %103 = arith.addf %100, %102 : vector<24x16xf32>
    %cst_56 = arith.constant dense<0.000000e+00> : vector<16xf32>
    %104 = vector.multi_reduction <add>, %89, %cst_56 [0] : vector<24x16xf32> to vector<16xf32>
    %105 = vector.shape_cast %104 : vector<16xf32> to vector<1x16xf32>
    %c0_57 = arith.constant 0 : index
    %c0_58 = arith.constant 0 : index
    %106 = vector.load %arg17[%c0_57, %c0_58] : memref<16x16xf32, #tpu.memory_space<vmem>>, vector<16x16xf32>
    %cst_59 = arith.constant dense<0.000000e+00> : vector<1x16xf32>
    %107 = tpu.matmul %105, %106, %cst_59 {dimension_numbers = #tpu.dot_dimension_numbers<[1], [0], [0], [1], [0, 0, 1, 1], [], []>} : vector<1x16xf32>, vector<16x16xf32>, vector<1x16xf32> -> vector<1x16xf32>
    %c0_60 = arith.constant 0 : index
    %c0_61 = arith.constant 0 : index
    %108 = vector.load %arg18[%c0_60, %c0_61] : memref<1x16xf32, #tpu.memory_space<vmem>>, vector<1x16xf32>
    %109 = arith.addf %107, %108 : vector<1x16xf32>
    %110 = vector.broadcast %109 : vector<1x16xf32> to vector<24x16xf32>
    %111 = arith.addf %103, %110 : vector<24x16xf32>
    %cst_62 = arith.constant dense<0.000000e+00> : vector<24xf32>
    %112 = vector.multi_reduction <add>, %111, %cst_62 [1] : vector<24x16xf32> to vector<24xf32>
    %113 = vector.shape_cast %112 : vector<24xf32> to vector<24x1xf32>
    %cst_63 = arith.constant 1.600000e+01 : f32
    %114 = vector.broadcast %cst_63 : f32 to vector<24x1xf32>
    %115 = arith.divf %113, %114 : vector<24x1xf32>
    %116 = vector.broadcast %115 : vector<24x1xf32> to vector<24x16xf32>
    %117 = arith.subf %111, %116 : vector<24x16xf32>
    %118 = arith.mulf %117, %117 : vector<24x16xf32>
    %cst_64 = arith.constant dense<0.000000e+00> : vector<24xf32>
    %119 = vector.multi_reduction <add>, %118, %cst_64 [1] : vector<24x16xf32> to vector<24xf32>
    %120 = vector.shape_cast %119 : vector<24xf32> to vector<24x1xf32>
    %cst_65 = arith.constant 1.600000e+01 : f32
    %121 = vector.broadcast %cst_65 : f32 to vector<24x1xf32>
    %122 = arith.divf %120, %121 : vector<24x1xf32>
    %123 = vector.broadcast %115 : vector<24x1xf32> to vector<24x16xf32>
    %124 = arith.subf %111, %123 : vector<24x16xf32>
    %cst_66 = arith.constant 9.99999974E-6 : f32
    %125 = vector.broadcast %cst_66 : f32 to vector<24x1xf32>
    %126 = arith.addf %122, %125 : vector<24x1xf32>
    %127 = math.rsqrt %126 : vector<24x1xf32>
    %128 = vector.broadcast %127 : vector<24x1xf32> to vector<24x16xf32>
    %129 = arith.mulf %124, %128 : vector<24x16xf32>
    %130 = arith.addf %129, %89 : vector<24x16xf32>
    %131 = vector.broadcast %34 : vector<24x1xf32> to vector<24x16xf32>
    %132 = arith.mulf %130, %131 : vector<24x16xf32>
    %133 = tpu.concatenate %89, %132 in 1 : vector<24x16xf32>, vector<24x16xf32> -> vector<24x32xf32>
    %c0_67 = arith.constant 0 : index
    %c0_68 = arith.constant 0 : index
    %134 = vector.load %arg23[%c0_67, %c0_68] : memref<32x64xf32, #tpu.memory_space<vmem>>, vector<32x64xf32>
    %cst_69 = arith.constant dense<0.000000e+00> : vector<24x64xf32>
    %135 = tpu.matmul %133, %134, %cst_69 {dimension_numbers = #tpu.dot_dimension_numbers<[1], [0], [0], [1], [0, 0, 1, 1], [], []>} : vector<24x32xf32>, vector<32x64xf32>, vector<24x64xf32> -> vector<24x64xf32>
    %c0_70 = arith.constant 0 : index
    %c0_71 = arith.constant 0 : index
    %136 = vector.load %arg24[%c0_70, %c0_71] : memref<1x64xf32, #tpu.memory_space<vmem>>, vector<1x64xf32>
    %137 = vector.broadcast %136 : vector<1x64xf32> to vector<24x64xf32>
    %138 = arith.addf %135, %137 : vector<24x64xf32>
    %cst_72 = arith.constant 0.000000e+00 : f32
    %139 = vector.broadcast %cst_72 : f32 to vector<24x64xf32>
    %140 = arith.maximumf %138, %139 : vector<24x64xf32>
    %141 = vector.broadcast %34 : vector<24x1xf32> to vector<24x64xf32>
    %142 = arith.mulf %140, %141 : vector<24x64xf32>
    %cst_73 = arith.constant dense<0.000000e+00> : vector<64xf32>
    %143 = vector.multi_reduction <add>, %142, %cst_73 [0] : vector<24x64xf32> to vector<64xf32>
    %144 = vector.shape_cast %143 : vector<64xf32> to vector<1x64xf32>
    %c0_74 = arith.constant 0 : index
    %c0_75 = arith.constant 0 : index
    %145 = vector.load %arg25[%c0_74, %c0_75] : memref<1x64xf32, #tpu.memory_space<vmem>>, vector<1x64xf32>
    %146 = arith.mulf %144, %145 : vector<1x64xf32>
    %cst_76 = arith.constant dense<0.000000e+00> : vector<1xf32>
    %147 = vector.multi_reduction <add>, %146, %cst_76 [1] : vector<1x64xf32> to vector<1xf32>
    %148 = vector.shape_cast %147 : vector<1xf32> to vector<1x1xf32>
    %c0_77 = arith.constant 0 : index
    %c0_78 = arith.constant 0 : index
    %149 = vector.load %arg26[%c0_77, %c0_78] : memref<1x1xf32, #tpu.memory_space<vmem>>, vector<1x1xf32>
    %150 = arith.addf %148, %149 : vector<1x1xf32>
    %c0_79 = arith.constant 0 : index
    %c0_80 = arith.constant 0 : index
    %c0_81 = arith.constant 0 : index
    %151 = vector.load %arg27[%c0_79, %c0_80, %c0_81] : memref<1x1x1xf32, #tpu.memory_space<vmem>>, vector<1x1x1xf32>
    %152 = vector.shape_cast %151 : vector<1x1x1xf32> to vector<1x1xf32>
    %153 = vector.shape_cast %150 : vector<1x1xf32> to vector<1x1x1xf32>
    tpu.vector_store %arg27[%c0_79, %c0_80, %c0_81], %153 {strides = array<i32>} : memref<1x1x1xf32, #tpu.memory_space<vmem>>, vector<1x1x1xf32>,
    return
  }
  func.func @transform_0(%arg0: i32) -> (i32, i32, i32) {
    %c0_i32 = arith.constant 0 : i32
    %c0_i32_0 = arith.constant 0 : i32
    %c0_i32_1 = arith.constant 0 : i32
    return %arg0, %c0_i32, %c0_i32_0 : i32, i32, i32
  }
  func.func @transform_1(%arg0: i32) -> (i32, i32, i32) {
    %c0_i32 = arith.constant 0 : i32
    %c0_i32_0 = arith.constant 0 : i32
    %c0_i32_1 = arith.constant 0 : i32
    return %arg0, %c0_i32, %c0_i32_0 : i32, i32, i32
  }
  func.func @transform_2(%arg0: i32) -> (i32, i32) {
    %c0_i32 = arith.constant 0 : i32
    %c0_i32_0 = arith.constant 0 : i32
    %c0_i32_1 = arith.constant 0 : i32
    return %c0_i32, %c0_i32_0 : i32, i32
  }
  func.func @transform_3(%arg0: i32) -> (i32, i32) {
    %c0_i32 = arith.constant 0 : i32
    %c0_i32_0 = arith.constant 0 : i32
    %c0_i32_1 = arith.constant 0 : i32
    return %c0_i32, %c0_i32_0 : i32, i32
  }
  func.func @transform_4(%arg0: i32) -> (i32, i32) {
    %c0_i32 = arith.constant 0 : i32
    %c0_i32_0 = arith.constant 0 : i32
    %c0_i32_1 = arith.constant 0 : i32
    return %c0_i32, %c0_i32_0 : i32, i32
  }
  func.func @transform_5(%arg0: i32) -> (i32, i32) {
    %c0_i32 = arith.constant 0 : i32
    %c0_i32_0 = arith.constant 0 : i32
    %c0_i32_1 = arith.constant 0 : i32
    return %c0_i32, %c0_i32_0 : i32, i32
  }
  func.func @transform_6(%arg0: i32) -> (i32, i32) {
    %c0_i32 = arith.constant 0 : i32
    %c0_i32_0 = arith.constant 0 : i32
    %c0_i32_1 = arith.constant 0 : i32
    return %c0_i32, %c0_i32_0 : i32, i32
  }
  func.func @transform_7(%arg0: i32) -> (i32, i32) {
    %c0_i32 = arith.constant 0 : i32
    %c0_i32_0 = arith.constant 0 : i32
    %c0_i32_1 = arith.constant 0 : i32
    return %c0_i32, %c0_i32_0 : i32, i32
  }
  func.func @transform_8(%arg0: i32) -> (i32, i32) {
    %c0_i32 = arith.constant 0 : i32
    %c0_i32_0 = arith.constant 0 : i32
    %c0_i32_1 = arith.constant 0 : i32
    return %c0_i32, %c0_i32_0 : i32, i32
  }
  func.func @transform_9(%arg0: i32) -> (i32, i32) {
    %c0_i32 = arith.constant 0 : i32
    %c0_i32_0 = arith.constant 0 : i32
    %c0_i32_1 = arith.constant 0 : i32
    return %c0_i32, %c0_i32_0 : i32, i32
  }
  func.func @transform_10(%arg0: i32) -> (i32, i32) {
    %c0_i32 = arith.constant 0 : i32
    %c0_i32_0 = arith.constant 0 : i32
    %c0_i32_1 = arith.constant 0 : i32
    return %c0_i32, %c0_i32_0 : i32, i32
  }
  func.func @transform_11(%arg0: i32) -> (i32, i32) {
    %c0_i32 = arith.constant 0 : i32
    %c0_i32_0 = arith.constant 0 : i32
    %c0_i32_1 = arith.constant 0 : i32
    return %c0_i32, %c0_i32_0 : i32, i32
  }
  func.func @transform_12(%arg0: i32) -> (i32, i32) {
    %c0_i32 = arith.constant 0 : i32
    %c0_i32_0 = arith.constant 0 : i32
    %c0_i32_1 = arith.constant 0 : i32
    return %c0_i32, %c0_i32_0 : i32, i32
  }
  func.func @transform_13(%arg0: i32) -> (i32, i32) {
    %c0_i32 = arith.constant 0 : i32
    %c0_i32_0 = arith.constant 0 : i32
    %c0_i32_1 = arith.constant 0 : i32
    return %c0_i32, %c0_i32_0 : i32, i32
  }
  func.func @transform_14(%arg0: i32) -> (i32, i32) {
    %c0_i32 = arith.constant 0 : i32
    %c0_i32_0 = arith.constant 0 : i32
    %c0_i32_1 = arith.constant 0 : i32
    return %c0_i32, %c0_i32_0 : i32, i32
  }
  func.func @transform_15(%arg0: i32) -> (i32, i32) {
    %c0_i32 = arith.constant 0 : i32
    %c0_i32_0 = arith.constant 0 : i32
    %c0_i32_1 = arith.constant 0 : i32
    return %c0_i32, %c0_i32_0 : i32, i32
  }
  func.func @transform_16(%arg0: i32) -> (i32, i32) {
    %c0_i32 = arith.constant 0 : i32
    %c0_i32_0 = arith.constant 0 : i32
    %c0_i32_1 = arith.constant 0 : i32
    return %c0_i32, %c0_i32_0 : i32, i32
  }
  func.func @transform_17(%arg0: i32) -> (i32, i32) {
    %c0_i32 = arith.constant 0 : i32
    %c0_i32_0 = arith.constant 0 : i32
    %c0_i32_1 = arith.constant 0 : i32
    return %c0_i32, %c0_i32_0 : i32, i32
  }
  func.func @transform_18(%arg0: i32) -> (i32, i32) {
    %c0_i32 = arith.constant 0 : i32
    %c0_i32_0 = arith.constant 0 : i32
    %c0_i32_1 = arith.constant 0 : i32
    return %c0_i32, %c0_i32_0 : i32, i32
  }
  func.func @transform_19(%arg0: i32) -> (i32, i32) {
    %c0_i32 = arith.constant 0 : i32
    %c0_i32_0 = arith.constant 0 : i32
    %c0_i32_1 = arith.constant 0 : i32
    return %c0_i32, %c0_i32_0 : i32, i32
  }
  func.func @transform_20(%arg0: i32) -> (i32, i32) {
    %c0_i32 = arith.constant 0 : i32
    %c0_i32_0 = arith.constant 0 : i32
    %c0_i32_1 = arith.constant 0 : i32
    return %c0_i32, %c0_i32_0 : i32, i32
  }
  func.func @transform_21(%arg0: i32) -> (i32, i32) {
    %c0_i32 = arith.constant 0 : i32
    %c0_i32_0 = arith.constant 0 : i32
    %c0_i32_1 = arith.constant 0 : i32
    return %c0_i32, %c0_i32_0 : i32, i32
  }
  func.func @transform_22(%arg0: i32) -> (i32, i32) {
    %c0_i32 = arith.constant 0 : i32
    %c0_i32_0 = arith.constant 0 : i32
    %c0_i32_1 = arith.constant 0 : i32
    return %c0_i32, %c0_i32_0 : i32, i32
  }
  func.func @transform_23(%arg0: i32) -> (i32, i32) {
    %c0_i32 = arith.constant 0 : i32
    %c0_i32_0 = arith.constant 0 : i32
    %c0_i32_1 = arith.constant 0 : i32
    return %c0_i32, %c0_i32_0 : i32, i32
  }
  func.func @transform_24(%arg0: i32) -> (i32, i32) {
    %c0_i32 = arith.constant 0 : i32
    %c0_i32_0 = arith.constant 0 : i32
    %c0_i32_1 = arith.constant 0 : i32
    return %c0_i32, %c0_i32_0 : i32, i32
  }
  func.func @transform_25(%arg0: i32) -> (i32, i32) {
    %c0_i32 = arith.constant 0 : i32
    %c0_i32_0 = arith.constant 0 : i32
    %c0_i32_1 = arith.constant 0 : i32
    return %c0_i32, %c0_i32_0 : i32, i32
  }
  func.func @transform_26(%arg0: i32) -> (i32, i32, i32) {
    %c0_i32 = arith.constant 0 : i32
    %c0_i32_0 = arith.constant 0 : i32
    %c0_i32_1 = arith.constant 0 : i32
    return %arg0, %c0_i32, %c0_i32_0 : i32, i32, i32
  }
}

</mosaic_0001>

<llo_original>
// kernel: tpu_custom_call.1
$region0: #{tpu_custom_call.1}
  #allocation0 [shape = 'u32[]', space=smem, size = 0x4, offset = 0x4, fixed_abs, tag = 'smem constant byte address 0x4 - core index']
  #allocation1 [shape = 'u32[72,128]{1,0:T(1,128)}', space=vmem, size = 0x9000, scoped, tag = 'internal scratch']
  #allocation2 [shape = 'f32[1,1]{1,0:T(1,128)S(1)}', space=vmem, size = 0x200, scoped, tag = 'scoped memory for tpu_custom_call.1']
  %s0 = inlined_call_operand.vmem [shape: f32[2,16,4], index: 0, kind: input, shape index: {}]
  %s1 = inlined_call_operand.vmem [shape: bf16[2,24,24], index: 1, kind: input, shape index: {}]
  %s2 = inlined_call_operand.vmem [shape: f32[9,32], index: 2, kind: input, shape index: {}]
  %s3 = inlined_call_operand.vmem [shape: f32[1,32], index: 3, kind: input, shape index: {}]
  %s4 = inlined_call_operand.vmem [shape: f32[32,16], index: 4, kind: input, shape index: {}]
  %s5 = inlined_call_operand.hbm [shape: f32[1,16], index: 5, kind: input, shape index: {}]
  %s6 = inlined_call_operand.vmem [shape: f32[9,16], index: 6, kind: input, shape index: {}]
  %s7 = inlined_call_operand.hbm [shape: f32[1,16], index: 7, kind: input, shape index: {}]
  %s8 = inlined_call_operand.vmem [shape: f32[9,16], index: 8, kind: input, shape index: {}]
  %s9 = inlined_call_operand.hbm [shape: f32[1,16], index: 9, kind: input, shape index: {}]
  %s10 = inlined_call_operand.hbm [shape: f32[9,16], index: 10, kind: input, shape index: {}]
  %s11 = inlined_call_operand.hbm [shape: f32[1,16], index: 11, kind: input, shape index: {}]
  %s12 = inlined_call_operand.hbm [shape: f32[16,32], index: 12, kind: input, shape index: {}]
  %s13 = inlined_call_operand.hbm [shape: f32[1,32], index: 13, kind: input, shape index: {}]
  %s14 = inlined_call_operand.vmem [shape: f32[32,16], index: 14, kind: input, shape index: {}]
  %s15 = inlined_call_operand.hbm [shape: f32[1,16], index: 15, kind: input, shape index: {}]
  %s16 = inlined_call_operand.vmem [shape: f32[16,16], index: 16, kind: input, shape index: {}]
  %s17 = inlined_call_operand.hbm [shape: f32[1,16], index: 17, kind: input, shape index: {}]
  %s18 = inlined_call_operand.hbm [shape: f32[16,16], index: 18, kind: input, shape index: {}]
  %s19 = inlined_call_operand.vmem [shape: f32[1,16], index: 19, kind: input, shape index: {}]
  %s20 = inlined_call_operand.hbm [shape: f32[16,16], index: 20, kind: input, shape index: {}]
  %s21 = inlined_call_operand.vmem [shape: f32[1,16], index: 21, kind: input, shape index: {}]
  %s22 = inlined_call_operand.vmem [shape: f32[32,64], index: 22, kind: input, shape index: {}]
  %s23 = inlined_call_operand.vmem [shape: f32[1,64], index: 23, kind: input, shape index: {}]
  %s24 = inlined_call_operand.vmem [shape: f32[1,64], index: 24, kind: input, shape index: {}]
  %s25 = inlined_call_operand.<no memory space> [shape: f32[1,1], index: 25, kind: input, shape index: {}]
  %s26 = inlined_call_operand.vmem [shape: f32[2,1,1], index: 26, kind: output, shape index: {}]
  %s27 = sld [smem:[#allocation0]]
  $region181: #{tpu_custom_call.1} parent=0
    _
  %s29 = ssub.s32 1, %s27
  %s30 = scalar_select 0, %s29, %s27
  %v31 = vstv %s25
  %32 = vst [vmem:[#allocation2] sm:$0x1] %v31
  $region1: #{tpu_custom_call.1} parent=0
    #allocation3 [shape = 'u8[512]{0}', space=vmem, size = 0x400, scoped, tag = 'input window, operand 5, single buffered']
    #allocation4 [shape = 's32[2]{0}', space=sflag, size = 0x8, scoped, tag = 'scoped memory for tpu_custom_call.1']
    #allocation5 [shape = 'u8[512]{0}', space=vmem, size = 0x400, scoped, tag = 'input window, operand 7, single buffered']
    #allocation6 [shape = 's32[1]{0}', space=sflag, size = 0x4, scoped, tag = 'scoped memory for tpu_custom_call.1']
    #allocation7 [shape = 'u8[512]{0}', space=vmem, size = 0x400, scoped, tag = 'input window, operand 9, single buffered']
    #allocation8 [shape = 'u8[8192]{0}', space=vmem, size = 0x2000, scoped, tag = 'input window, operand 10, single buffered']
    #allocation9 [shape = 's32[1]{0}', space=sflag, size = 0x4, scoped, tag = 'scoped memory for tpu_custom_call.1']
    #allocation10 [shape = 'u8[512]{0}', space=vmem, size = 0x400, scoped, tag = 'input window, operand 11, single buffered']
    #allocation11 [shape = 'u8[8192]{0}', space=vmem, size = 0x2000, scoped, tag = 'input window, operand 12, single buffered']
    #allocation12 [shape = 's32[1]{0}', space=sflag, size = 0x4, scoped, tag = 'scoped memory for tpu_custom_call.1']
    #allocation13 [shape = 'u8[512]{0}', space=vmem, size = 0x400, scoped, tag = 'input window, operand 13, single buffered']
    #allocation14 [shape = 'u8[512]{0}', space=vmem, size = 0x400, scoped, tag = 'input window, operand 15, single buffered']
    #allocation15 [shape = 's32[1]{0}', space=sflag, size = 0x4, scoped, tag = 'scoped memory for tpu_custom_call.1']
    #allocation16 [shape = 'u8[512]{0}', space=vmem, size = 0x400, scoped, tag = 'input window, operand 17, single buffered']
    #allocation17 [shape = 'u8[8192]{0}', space=vmem, size = 0x2000, scoped, tag = 'input window, operand 18, single buffered']
    #allocation18 [shape = 's32[1]{0}', space=sflag, size = 0x4, scoped, tag = 'scoped memory for tpu_custom_call.1']
    #allocation19 [shape = 'u8[8192]{0}', space=vmem, size = 0x2000, scoped, tag = 'input window, operand 20, single buffered']
    %33 = vsyncpa [#allocation4], 0
    %34 = vsyncpa [#allocation6], 0
    %35 = vsyncpa [#allocation9], 0
    %36 = vsyncpa [#allocation12], 0
    %37 = vsyncpa [#allocation15], 0
    %38 = vsyncpa [#allocation18], 0
    loop: start=0, step=1, limit=4
    $region2: #{tpu_custom_call.1} parent=1 // loop_pre_header
      _
    $region3: #{tpu_custom_call.1} parent=1 // loop_header
      %s40 = sphi 0, %s44
      %p41 = scmp.ge.s32.totalorder %s40, 4
      %s50 = sphi 0, %s52
      %s53 = sphi 0, %s50
      %s54 = sphi 0, %s53
      %s70 = sphi 0, %s54
      %s76 = sphi 0, %s78
      %s79 = sphi 0, %s76
      %s80 = sphi 0, %s79
      %s96 = sphi 0, %s80
      %s100 = sphi 0, %s100
      %s102 = sphi 0, %s100
      %s103 = sphi 0, %s102
      %s117 = sphi 0, %s103
      %s121 = sphi 0, %s121
      %s123 = sphi 0, %s121
      %s124 = sphi 0, %s123
      %s138 = sphi 0, %s124
      %s142 = sphi 0, %s142
      %s144 = sphi 0, %s142
      %s145 = sphi 0, %s144
      %s159 = sphi 0, %s145
      %s163 = sphi 0, %s163
      %s165 = sphi 0, %s163
      %s166 = sphi 0, %s165
      %s180 = sphi 0, %s166
      %s184 = sphi 0, %s184
      %s186 = sphi 0, %s184
      %s187 = sphi 0, %s186
      %s201 = sphi 0, %s187
      %s205 = sphi 0, %s205
      %s207 = sphi 0, %s205
      %s208 = sphi 0, %s207
      %s222 = sphi 0, %s208
      %s226 = sphi 0, %s226
      %s228 = sphi 0, %s226
      %s229 = sphi 0, %s228
      %s243 = sphi 0, %s229
      %s247 = sphi 0, %s247
      %s249 = sphi 0, %s247
      %s250 = sphi 0, %s249
      %s264 = sphi 0, %s250
      %s268 = sphi 0, %s268
      %s270 = sphi 0, %s268
      %s271 = sphi 0, %s270
      %s285 = sphi 0, %s271
      %s289 = sphi 0, %s289
      %s291 = sphi 0, %s289
      %s292 = sphi 0, %s291
      %s306 = sphi 0, %s292
      %s310 = sphi 0, %s310
      %s312 = sphi 0, %s310
      %s313 = sphi 0, %s312
      %s327 = sphi 0, %s313
      %s331 = sphi 0, %s331
      %s333 = sphi 0, %s331
      %s334 = sphi 0, %s333
      %s348 = sphi 0, %s334
      %s352 = sphi 0, %s352
      %s354 = sphi 0, %s352
      %s355 = sphi 0, %s354
      %s369 = sphi 0, %s355
      %s373 = sphi 0, %s373
      %s375 = sphi 0, %s373
      %s376 = sphi 0, %s375
      %s390 = sphi 0, %s376
      %s394 = sphi 0, %s394
      %s396 = sphi 0, %s394
      %s397 = sphi 0, %s396
      %s411 = sphi 0, %s397
      %s415 = sphi 0, %s415
      %s417 = sphi 0, %s415
      %s418 = sphi 0, %s417
      %s432 = sphi 0, %s418
      %s436 = sphi 0, %s436
      %s438 = sphi 0, %s436
      %s439 = sphi 0, %s438
      %s453 = sphi 0, %s439
      %s457 = sphi 0, %s457
      %s459 = sphi 0, %s457
      %s460 = sphi 0, %s459
      %s474 = sphi 0, %s460
      %s478 = sphi 0, %s478
      %s480 = sphi 0, %s478
      %s481 = sphi 0, %s480
      %s495 = sphi 0, %s481
      %s499 = sphi 0, %s499
      %s501 = sphi 0, %s499
      %s502 = sphi 0, %s501
      %s516 = sphi 0, %s502
      %s520 = sphi 0, %s520
      %s522 = sphi 0, %s520
      %s523 = sphi 0, %s522
      %s537 = sphi 0, %s523
      %s541 = sphi 0, %s541
      %s543 = sphi 0, %s541
      %s544 = sphi 0, %s543
      %s558 = sphi 0, %s544
      %s562 = sphi 0, %s562
      %s564 = sphi 0, %s562
      %s565 = sphi 0, %s564
      %s579 = sphi 0, %s565
      %s583 = sphi 0, %s583
      %s585 = sphi 0, %s583
      %s586 = sphi 0, %s585
      %s600 = sphi 0, %s586
      %s606 = sphi 0, %s608
      %s609 = sphi 0, %s606
      %s610 = sphi 0, %s609
      %s626 = sphi 0, %s610
    $region4: #{tpu_custom_call.1} parent=1 // loop_header_branch
      %43 = sbr.rel (%p41) target = $region8
    $region5: #{tpu_custom_call.1} parent=1 // loop_body
      %s45 = ssub.s32 %s40, 1
      %s46 = ssub.s32 %s40, 2
      %s47 = sadd.s32 %s40, 1
      %s48 = ssub.s32 %s40, %s47
      %p49 = scmp.eq.s32.totalorder %s48, 0
      %s51 = sadd.s32 %s50, 1
      %s52 = scalar_select %p49, %s50, %s51
      %p55 = pneg %p49
      %p56 = scmp.eq.s32.totalorder %s40, 1
      %p57 = por %p55, %p56
      %p58 = scmp.ne.s32.totalorder %s50, %s53
      %p59 = scmp.eq.s32.totalorder %s40, 0
      %p60 = por %p58, %p59
      %p61 = scmp.ne.s32.totalorder %s50, %s53
      %p62 = scmp.eq.s32.totalorder %s45, 1
      %p63 = por %p61, %p62
      %p64 = scmp.ne.s32.totalorder %s53, %s54
      %p65 = scmp.eq.s32.totalorder %s45, 0
      %p66 = por %p64, %p65
      %p67 = scmp.ne.s32.totalorder %s53, %s54
      %p68 = scmp.eq.s32.totalorder %s46, 1
      %p69 = por %p67, %p68
      %p71 = scmp.ne.s32.totalorder %s54, %s70
      %p72 = scmp.eq.s32.totalorder %s46, 0
      %p73 = por %p71, %p72
      %s74 = ssub.s32 %s40, %s47
      %p75 = scmp.eq.s32.totalorder %s74, 0
      %s77 = sadd.s32 %s76, 1
      %s78 = scalar_select %p75, %s76, %s77
      %p81 = pneg %p75
      %p82 = scmp.eq.s32.totalorder %s40, 1
      %p83 = por %p81, %p82
      %p84 = scmp.ne.s32.totalorder %s76, %s79
      %p85 = scmp.eq.s32.totalorder %s40, 0
      %p86 = por %p84, %p85
      %p87 = scmp.ne.s32.totalorder %s76, %s79
      %p88 = scmp.eq.s32.totalorder %s45, 1
      %p89 = por %p87, %p88
      %p90 = scmp.ne.s32.totalorder %s79, %s80
      %p91 = scmp.eq.s32.totalorder %s45, 0
      %p92 = por %p90, %p91
      %p93 = scmp.ne.s32.totalorder %s79, %s80
      %p94 = scmp.eq.s32.totalorder %s46, 1
      %p95 = por %p93, %p94
      %p97 = scmp.ne.s32.totalorder %s80, %s96
      %p98 = scmp.eq.s32.totalorder %s46, 0
      %p99 = por %p97, %p98
      %s101 = sadd.s32 %s100, 1
      %p104 = scmp.eq.s32.totalorder %s40, 1
      %p105 = scmp.ne.s32.totalorder %s100, %s102
      %p106 = scmp.eq.s32.totalorder %s40, 0
      %p107 = por %p105, %p106
      %p108 = scmp.ne.s32.totalorder %s100, %s102
      %p109 = scmp.eq.s32.totalorder %s45, 1
      %p110 = por %p108, %p109
      %p111 = scmp.ne.s32.totalorder %s102, %s103
      %p112 = scmp.eq.s32.totalorder %s45, 0
      %p113 = por %p111, %p112
      %p114 = scmp.ne.s32.totalorder %s102, %s103
      %p115 = scmp.eq.s32.totalorder %s46, 1
      %p116 = por %p114, %p115
      %p118 = scmp.ne.s32.totalorder %s103, %s117
      %p119 = scmp.eq.s32.totalorder %s46, 0
      %p120 = por %p118, %p119
      %s122 = sadd.s32 %s121, 1
      %p125 = scmp.eq.s32.totalorder %s40, 1
      %p126 = scmp.ne.s32.totalorder %s121, %s123
      %p127 = scmp.eq.s32.totalorder %s40, 0
      %p128 = por %p126, %p127
      %p129 = scmp.ne.s32.totalorder %s121, %s123
      %p130 = scmp.eq.s32.totalorder %s45, 1
      %p131 = por %p129, %p130
      %p132 = scmp.ne.s32.totalorder %s123, %s124
      %p133 = scmp.eq.s32.totalorder %s45, 0
      %p134 = por %p132, %p133
      %p135 = scmp.ne.s32.totalorder %s123, %s124
      %p136 = scmp.eq.s32.totalorder %s46, 1
      %p137 = por %p135, %p136
      %p139 = scmp.ne.s32.totalorder %s124, %s138
      %p140 = scmp.eq.s32.totalorder %s46, 0
      %p141 = por %p139, %p140
      %s143 = sadd.s32 %s142, 1
      %p146 = scmp.eq.s32.totalorder %s40, 1
      %p147 = scmp.ne.s32.totalorder %s142, %s144
      %p148 = scmp.eq.s32.totalorder %s40, 0
      %p149 = por %p147, %p148
      %p150 = scmp.ne.s32.totalorder %s142, %s144
      %p151 = scmp.eq.s32.totalorder %s45, 1
      %p152 = por %p150, %p151
      %p153 = scmp.ne.s32.totalorder %s144, %s145
      %p154 = scmp.eq.s32.totalorder %s45, 0
      %p155 = por %p153, %p154
      %p156 = scmp.ne.s32.totalorder %s144, %s145
      %p157 = scmp.eq.s32.totalorder %s46, 1
      %p158 = por %p156, %p157
      %p160 = scmp.ne.s32.totalorder %s145, %s159
      %p161 = scmp.eq.s32.totalorder %s46, 0
      %p162 = por %p160, %p161
      %s164 = sadd.s32 %s163, 1
      %p167 = scmp.eq.s32.totalorder %s40, 1
      %p168 = scmp.ne.s32.totalorder %s163, %s165
      %p169 = scmp.eq.s32.totalorder %s40, 0
      %p170 = por %p168, %p169
      %p171 = scmp.ne.s32.totalorder %s163, %s165
      %p172 = scmp.eq.s32.totalorder %s45, 1
      %p173 = por %p171, %p172
      %p174 = scmp.ne.s32.totalorder %s165, %s166
      %p175 = scmp.eq.s32.totalorder %s45, 0
      %p176 = por %p174, %p175
      %p177 = scmp.ne.s32.totalorder %s165, %s166
      %p178 = scmp.eq.s32.totalorder %s46, 1
      %p179 = por %p177, %p178
      %p181 = scmp.ne.s32.totalorder %s166, %s180
      %p182 = scmp.eq.s32.totalorder %s46, 0
      %p183 = por %p181, %p182
      %s185 = sadd.s32 %s184, 1
      %p188 = scmp.eq.s32.totalorder %s40, 1
      %p189 = scmp.ne.s32.totalorder %s184, %s186
      %p190 = scmp.eq.s32.totalorder %s40, 0
      %p191 = por %p189, %p190
      %p192 = scmp.ne.s32.totalorder %s184, %s186
      %p193 = scmp.eq.s32.totalorder %s45, 1
      %p194 = por %p192, %p193
      %p195 = scmp.ne.s32.totalorder %s186, %s187
      %p196 = scmp.eq.s32.totalorder %s45, 0
      %p197 = por %p195, %p196
      %p198 = scmp.ne.s32.totalorder %s186, %s187
      %p199 = scmp.eq.s32.totalorder %s46, 1
      %p200 = por %p198, %p199
      %p202 = scmp.ne.s32.totalorder %s187, %s201
      %p203 = scmp.eq.s32.totalorder %s46, 0
      %p204 = por %p202, %p203
      %s206 = sadd.s32 %s205, 1
      %p209 = scmp.eq.s32.totalorder %s40, 1
      %p210 = scmp.ne.s32.totalorder %s205, %s207
      %p211 = scmp.eq.s32.totalorder %s40, 0
      %p212 = por %p210, %p211
      %p213 = scmp.ne.s32.totalorder %s205, %s207
      %p214 = scmp.eq.s32.totalorder %s45, 1
      %p215 = por %p213, %p214
      %p216 = scmp.ne.s32.totalorder %s207, %s208
      %p217 = scmp.eq.s32.totalorder %s45, 0
      %p218 = por %p216, %p217
      %p219 = scmp.ne.s32.totalorder %s207, %s208
      %p220 = scmp.eq.s32.totalorder %s46, 1
      %p221 = por %p219, %p220
      %p223 = scmp.ne.s32.totalorder %s208, %s222
      %p224 = scmp.eq.s32.totalorder %s46, 0
      %p225 = por %p223, %p224
      %s227 = sadd.s32 %s226, 1
      %p230 = scmp.eq.s32.totalorder %s40, 1
      %p231 = scmp.ne.s32.totalorder %s226, %s228
      %p232 = scmp.eq.s32.totalorder %s40, 0
      %p233 = por %p231, %p232
      %p234 = scmp.ne.s32.totalorder %s226, %s228
      %p235 = scmp.eq.s32.totalorder %s45, 1
      %p236 = por %p234, %p235
      %p237 = scmp.ne.s32.totalorder %s228, %s229
      %p238 = scmp.eq.s32.totalorder %s45, 0
      %p239 = por %p237, %p238
      %p240 = scmp.ne.s32.totalorder %s228, %s229
      %p241 = scmp.eq.s32.totalorder %s46, 1
      %p242 = por %p240, %p241
      %p244 = scmp.ne.s32.totalorder %s229, %s243
      %p245 = scmp.eq.s32.totalorder %s46, 0
      %p246 = por %p244, %p245
      %s248 = sadd.s32 %s247, 1
      %p251 = scmp.eq.s32.totalorder %s40, 1
      %p252 = scmp.ne.s32.totalorder %s247, %s249
      %p253 = scmp.eq.s32.totalorder %s40, 0
      %p254 = por %p252, %p253
      %p255 = scmp.ne.s32.totalorder %s247, %s249
      %p256 = scmp.eq.s32.totalorder %s45, 1
      %p257 = por %p255, %p256
      %p258 = scmp.ne.s32.totalorder %s249, %s250
      %p259 = scmp.eq.s32.totalorder %s45, 0
      %p260 = por %p258, %p259
      %p261 = scmp.ne.s32.totalorder %s249, %s250
      %p262 = scmp.eq.s32.totalorder %s46, 1
      %p263 = por %p261, %p262
      %p265 = scmp.ne.s32.totalorder %s250, %s264
      %p266 = scmp.eq.s32.totalorder %s46, 0
      %p267 = por %p265, %p266
      %s269 = sadd.s32 %s268, 1
      %p272 = scmp.eq.s32.totalorder %s40, 1
      %p273 = scmp.ne.s32.totalorder %s268, %s270
      %p274 = scmp.eq.s32.totalorder %s40, 0
      %p275 = por %p273, %p274
      %p276 = scmp.ne.s32.totalorder %s268, %s270
      %p277 = scmp.eq.s32.totalorder %s45, 1
      %p278 = por %p276, %p277
      %p279 = scmp.ne.s32.totalorder %s270, %s271
      %p280 = scmp.eq.s32.totalorder %s45, 0
      %p281 = por %p279, %p280
      %p282 = scmp.ne.s32.totalorder %s270, %s271
      %p283 = scmp.eq.s32.totalorder %s46, 1
      %p284 = por %p282, %p283
      %p286 = scmp.ne.s32.totalorder %s271, %s285
      %p287 = scmp.eq.s32.totalorder %s46, 0
      %p288 = por %p286, %p287
      %s290 = sadd.s32 %s289, 1
      %p293 = scmp.eq.s32.totalorder %s40, 1
      %p294 = scmp.ne.s32.totalorder %s289, %s291
      %p295 = scmp.eq.s32.totalorder %s40, 0
      %p296 = por %p294, %p295
      %p297 = scmp.ne.s32.totalorder %s289, %s291
      %p298 = scmp.eq.s32.totalorder %s45, 1
      %p299 = por %p297, %p298
      %p300 = scmp.ne.s32.totalorder %s291, %s292
      %p301 = scmp.eq.s32.totalorder %s45, 0
      %p302 = por %p300, %p301
      %p303 = scmp.ne.s32.totalorder %s291, %s292
      %p304 = scmp.eq.s32.totalorder %s46, 1
      %p305 = por %p303, %p304
      %p307 = scmp.ne.s32.totalorder %s292, %s306
      %p308 = scmp.eq.s32.totalorder %s46, 0
      %p309 = por %p307, %p308
      %s311 = sadd.s32 %s310, 1
      %p314 = scmp.eq.s32.totalorder %s40, 1
      %p315 = scmp.ne.s32.totalorder %s310, %s312
      %p316 = scmp.eq.s32.totalorder %s40, 0
      %p317 = por %p315, %p316
      %p318 = scmp.ne.s32.totalorder %s310, %s312
      %p319 = scmp.eq.s32.totalorder %s45, 1
      %p320 = por %p318, %p319
      %p321 = scmp.ne.s32.totalorder %s312, %s313
      %p322 = scmp.eq.s32.totalorder %s45, 0
      %p323 = por %p321, %p322
      %p324 = scmp.ne.s32.totalorder %s312, %s313
      %p325 = scmp.eq.s32.totalorder %s46, 1
      %p326 = por %p324, %p325
      %p328 = scmp.ne.s32.totalorder %s313, %s327
      %p329 = scmp.eq.s32.totalorder %s46, 0
      %p330 = por %p328, %p329
      %s332 = sadd.s32 %s331, 1
      %p335 = scmp.eq.s32.totalorder %s40, 1
      %p336 = scmp.ne.s32.totalorder %s331, %s333
      %p337 = scmp.eq.s32.totalorder %s40, 0
      %p338 = por %p336, %p337
      %p339 = scmp.ne.s32.totalorder %s331, %s333
      %p340 = scmp.eq.s32.totalorder %s45, 1
      %p341 = por %p339, %p340
      %p342 = scmp.ne.s32.totalorder %s333, %s334
      %p343 = scmp.eq.s32.totalorder %s45, 0
      %p344 = por %p342, %p343
      %p345 = scmp.ne.s32.totalorder %s333, %s334
      %p346 = scmp.eq.s32.totalorder %s46, 1
      %p347 = por %p345, %p346
      %p349 = scmp.ne.s32.totalorder %s334, %s348
      %p350 = scmp.eq.s32.totalorder %s46, 0
      %p351 = por %p349, %p350
      %s353 = sadd.s32 %s352, 1
      %p356 = scmp.eq.s32.totalorder %s40, 1
      %p357 = scmp.ne.s32.totalorder %s352, %s354
      %p358 = scmp.eq.s32.totalorder %s40, 0
      %p359 = por %p357, %p358
      %p360 = scmp.ne.s32.totalorder %s352, %s354
      %p361 = scmp.eq.s32.totalorder %s45, 1
      %p362 = por %p360, %p361
      %p363 = scmp.ne.s32.totalorder %s354, %s355
      %p364 = scmp.eq.s32.totalorder %s45, 0
      %p365 = por %p363, %p364
      %p366 = scmp.ne.s32.totalorder %s354, %s355
      %p367 = scmp.eq.s32.totalorder %s46, 1
      %p368 = por %p366, %p367
      %p370 = scmp.ne.s32.totalorder %s355, %s369
      %p371 = scmp.eq.s32.totalorder %s46, 0
      %p372 = por %p370, %p371
      %s374 = sadd.s32 %s373, 1
      %p377 = scmp.eq.s32.totalorder %s40, 1
      %p378 = scmp.ne.s32.totalorder %s373, %s375
      %p379 = scmp.eq.s32.totalorder %s40, 0
      %p380 = por %p378, %p379
      %p381 = scmp.ne.s32.totalorder %s373, %s375
      %p382 = scmp.eq.s32.totalorder %s45, 1
      %p383 = por %p381, %p382
      %p384 = scmp.ne.s32.totalorder %s375, %s376
      %p385 = scmp.eq.s32.totalorder %s45, 0
      %p386 = por %p384, %p385
      %p387 = scmp.ne.s32.totalorder %s375, %s376
      %p388 = scmp.eq.s32.totalorder %s46, 1
      %p389 = por %p387, %p388
      %p391 = scmp.ne.s32.totalorder %s376, %s390
      %p392 = scmp.eq.s32.totalorder %s46, 0
      %p393 = por %p391, %p392
      %s395 = sadd.s32 %s394, 1
      %p398 = scmp.eq.s32.totalorder %s40, 1
      %p399 = scmp.ne.s32.totalorder %s394, %s396
      %p400 = scmp.eq.s32.totalorder %s40, 0
      %p401 = por %p399, %p400
      %p402 = scmp.ne.s32.totalorder %s394, %s396
      %p403 = scmp.eq.s32.totalorder %s45, 1
      %p404 = por %p402, %p403
      %p405 = scmp.ne.s32.totalorder %s396, %s397
      %p406 = scmp.eq.s32.totalorder %s45, 0
      %p407 = por %p405, %p406
      %p408 = scmp.ne.s32.totalorder %s396, %s397
      %p409 = scmp.eq.s32.totalorder %s46, 1
      %p410 = por %p408, %p409
      %p412 = scmp.ne.s32.totalorder %s397, %s411
      %p413 = scmp.eq.s32.totalorder %s46, 0
      %p414 = por %p412, %p413
      %s416 = sadd.s32 %s415, 1
      %p419 = scmp.eq.s32.totalorder %s40, 1
      %p420 = scmp.ne.s32.totalorder %s415, %s417
      %p421 = scmp.eq.s32.totalorder %s40, 0
      %p422 = por %p420, %p421
      %p423 = scmp.ne.s32.totalorder %s415, %s417
      %p424 = scmp.eq.s32.totalorder %s45, 1
      %p425 = por %p423, %p424
      %p426 = scmp.ne.s32.totalorder %s417, %s418
      %p427 = scmp.eq.s32.totalorder %s45, 0
      %p428 = por %p426, %p427
      %p429 = scmp.ne.s32.totalorder %s417, %s418
      %p430 = scmp.eq.s32.totalorder %s46, 1
      %p431 = por %p429, %p430
      %p433 = scmp.ne.s32.totalorder %s418, %s432
      %p434 = scmp.eq.s32.totalorder %s46, 0
      %p435 = por %p433, %p434
      %s437 = sadd.s32 %s436, 1
      %p440 = scmp.eq.s32.totalorder %s40, 1
      %p441 = scmp.ne.s32.totalorder %s436, %s438
      %p442 = scmp.eq.s32.totalorder %s40, 0
      %p443 = por %p441, %p442
      %p444 = scmp.ne.s32.totalorder %s436, %s438
      %p445 = scmp.eq.s32.totalorder %s45, 1
      %p446 = por %p444, %p445
      %p447 = scmp.ne.s32.totalorder %s438, %s439
      %p448 = scmp.eq.s32.totalorder %s45, 0
      %p449 = por %p447, %p448
      %p450 = scmp.ne.s32.totalorder %s438, %s439
      %p451 = scmp.eq.s32.totalorder %s46, 1
      %p452 = por %p450, %p451
      %p454 = scmp.ne.s32.totalorder %s439, %s453
      %p455 = scmp.eq.s32.totalorder %s46, 0
      %p456 = por %p454, %p455
      %s458 = sadd.s32 %s457, 1
      %p461 = scmp.eq.s32.totalorder %s40, 1
      %p462 = scmp.ne.s32.totalorder %s457, %s459
      %p463 = scmp.eq.s32.totalorder %s40, 0
      %p464 = por %p462, %p463
      %p465 = scmp.ne.s32.totalorder %s457, %s459
      %p466 = scmp.eq.s32.totalorder %s45, 1
      %p467 = por %p465, %p466
      %p468 = scmp.ne.s32.totalorder %s459, %s460
      %p469 = scmp.eq.s32.totalorder %s45, 0
      %p470 = por %p468, %p469
      %p471 = scmp.ne.s32.totalorder %s459, %s460
      %p472 = scmp.eq.s32.totalorder %s46, 1
      %p473 = por %p471, %p472
      %p475 = scmp.ne.s32.totalorder %s460, %s474
      %p476 = scmp.eq.s32.totalorder %s46, 0
      %p477 = por %p475, %p476
      %s479 = sadd.s32 %s478, 1
      %p482 = scmp.eq.s32.totalorder %s40, 1
      %p483 = scmp.ne.s32.totalorder %s478, %s480
      %p484 = scmp.eq.s32.totalorder %s40, 0
      %p485 = por %p483, %p484
      %p486 = scmp.ne.s32.totalorder %s478, %s480
      %p487 = scmp.eq.s32.totalorder %s45, 1
      %p488 = por %p486, %p487
      %p489 = scmp.ne.s32.totalorder %s480, %s481
      %p490 = scmp.eq.s32.totalorder %s45, 0
      %p491 = por %p489, %p490
      %p492 = scmp.ne.s32.totalorder %s480, %s481
      %p493 = scmp.eq.s32.totalorder %s46, 1
      %p494 = por %p492, %p493
      %p496 = scmp.ne.s32.totalorder %s481, %s495
      %p497 = scmp.eq.s32.totalorder %s46, 0
      %p498 = por %p496, %p497
      %s500 = sadd.s32 %s499, 1
      %p503 = scmp.eq.s32.totalorder %s40, 1
      %p504 = scmp.ne.s32.totalorder %s499, %s501
      %p505 = scmp.eq.s32.totalorder %s40, 0
      %p506 = por %p504, %p505
      %p507 = scmp.ne.s32.totalorder %s499, %s501
      %p508 = scmp.eq.s32.totalorder %s45, 1
      %p509 = por %p507, %p508
      %p510 = scmp.ne.s32.totalorder %s501, %s502
      %p511 = scmp.eq.s32.totalorder %s45, 0
      %p512 = por %p510, %p511
      %p513 = scmp.ne.s32.totalorder %s501, %s502
      %p514 = scmp.eq.s32.totalorder %s46, 1
      %p515 = por %p513, %p514
      %p517 = scmp.ne.s32.totalorder %s502, %s516
      %p518 = scmp.eq.s32.totalorder %s46, 0
      %p519 = por %p517, %p518
      %s521 = sadd.s32 %s520, 1
      %p524 = scmp.eq.s32.totalorder %s40, 1
      %p525 = scmp.ne.s32.totalorder %s520, %s522
      %p526 = scmp.eq.s32.totalorder %s40, 0
      %p527 = por %p525, %p526
      %p528 = scmp.ne.s32.totalorder %s520, %s522
      %p529 = scmp.eq.s32.totalorder %s45, 1
      %p530 = por %p528, %p529
      %p531 = scmp.ne.s32.totalorder %s522, %s523
      %p532 = scmp.eq.s32.totalorder %s45, 0
      %p533 = por %p531, %p532
      %p534 = scmp.ne.s32.totalorder %s522, %s523
      %p535 = scmp.eq.s32.totalorder %s46, 1
      %p536 = por %p534, %p535
      %p538 = scmp.ne.s32.totalorder %s523, %s537
      %p539 = scmp.eq.s32.totalorder %s46, 0
      %p540 = por %p538, %p539
      %s542 = sadd.s32 %s541, 1
      %p545 = scmp.eq.s32.totalorder %s40, 1
      %p546 = scmp.ne.s32.totalorder %s541, %s543
      %p547 = scmp.eq.s32.totalorder %s40, 0
      %p548 = por %p546, %p547
      %p549 = scmp.ne.s32.totalorder %s541, %s543
      %p550 = scmp.eq.s32.totalorder %s45, 1
      %p551 = por %p549, %p550
      %p552 = scmp.ne.s32.totalorder %s543, %s544
      %p553 = scmp.eq.s32.totalorder %s45, 0
      %p554 = por %p552, %p553
      %p555 = scmp.ne.s32.totalorder %s543, %s544
      %p556 = scmp.eq.s32.totalorder %s46, 1
      %p557 = por %p555, %p556
      %p559 = scmp.ne.s32.totalorder %s544, %s558
      %p560 = scmp.eq.s32.totalorder %s46, 0
      %p561 = por %p559, %p560
      %s563 = sadd.s32 %s562, 1
      %p566 = scmp.eq.s32.totalorder %s40, 1
      %p567 = scmp.ne.s32.totalorder %s562, %s564
      %p568 = scmp.eq.s32.totalorder %s40, 0
      %p569 = por %p567, %p568
      %p570 = scmp.ne.s32.totalorder %s562, %s564
      %p571 = scmp.eq.s32.totalorder %s45, 1
      %p572 = por %p570, %p571
      %p573 = scmp.ne.s32.totalorder %s564, %s565
      %p574 = scmp.eq.s32.totalorder %s45, 0
      %p575 = por %p573, %p574
      %p576 = scmp.ne.s32.totalorder %s564, %s565
      %p577 = scmp.eq.s32.totalorder %s46, 1
      %p578 = por %p576, %p577
      %p580 = scmp.ne.s32.totalorder %s565, %s579
      %p581 = scmp.eq.s32.totalorder %s46, 0
      %p582 = por %p580, %p581
      %s584 = sadd.s32 %s583, 1
      %p587 = scmp.eq.s32.totalorder %s40, 1
      %p588 = scmp.ne.s32.totalorder %s583, %s585
      %p589 = scmp.eq.s32.totalorder %s40, 0
      %p590 = por %p588, %p589
      %p591 = scmp.ne.s32.totalorder %s583, %s585
      %p592 = scmp.eq.s32.totalorder %s45, 1
      %p593 = por %p591, %p592
      %p594 = scmp.ne.s32.totalorder %s585, %s586
      %p595 = scmp.eq.s32.totalorder %s45, 0
      %p596 = por %p594, %p595
      %p597 = scmp.ne.s32.totalorder %s585, %s586
      %p598 = scmp.eq.s32.totalorder %s46, 1
      %p599 = por %p597, %p598
      %p601 = scmp.ne.s32.totalorder %s586, %s600
      %p602 = scmp.eq.s32.totalorder %s46, 0
      %p603 = por %p601, %p602
      %s604 = ssub.s32 %s40, %s47
      %p605 = scmp.eq.s32.totalorder %s604, 0
      %s607 = sadd.s32 %s606, 1
      %s608 = scalar_select %p605, %s606, %s607
      %p611 = pneg %p605
      %p612 = scmp.eq.s32.totalorder %s40, 1
      %p613 = por %p611, %p612
      %p614 = scmp.ne.s32.totalorder %s606, %s609
      %p615 = scmp.eq.s32.totalorder %s40, 0
      %p616 = por %p614, %p615
      %p617 = scmp.ne.s32.totalorder %s606, %s609
      %p618 = scmp.eq.s32.totalorder %s45, 1
      %p619 = por %p617, %p618
      %p620 = scmp.ne.s32.totalorder %s609, %s610
      %p621 = scmp.eq.s32.totalorder %s45, 0
      %p622 = por %p620, %p621
      %p623 = scmp.ne.s32.totalorder %s609, %s610
      %p624 = scmp.eq.s32.totalorder %s46, 1
      %p625 = por %p623, %p624
      %p627 = scmp.ne.s32.totalorder %s610, %s626
      %p628 = scmp.eq.s32.totalorder %s46, 0
      %p629 = por %p627, %p628
      %p630 = scmp.le.s32.totalorder 1, %s40
      %p631 = scmp.lt.s32.totalorder %s40, 3
      %p632 = pnand %p630, %p631
      %p633 = pneg %p632
      // Predicated region
      $region9: #{tpu_custom_call.1} parent=5 // pred_check
        _
      $region10: #{tpu_custom_call.1} parent=5 // pred_check_branch
        %635 = sbr.rel (%p632) target = $region12
      $region11: #{tpu_custom_call.1} parent=5 // pred_region
        %s636 = ssub.s32 %s40, 1
        // Predicated region
        $region13: #{tpu_custom_call.1} parent=11 // pred_check
          %p637 = pneg %p113
        $region14: #{tpu_custom_call.1} parent=11 // pred_check_branch
          %639 = sbr.rel (%p637) target = $region16
        $region15: #{tpu_custom_call.1} parent=11 // pred_region
          _
        $region16: #{tpu_custom_call.1} parent=11 // pred_fallthru
          _
        // Predicated region
        $region17: #{tpu_custom_call.1} parent=11 // pred_check
          %p640 = pneg %p134
        $region18: #{tpu_custom_call.1} parent=11 // pred_check_branch
          %642 = sbr.rel (%p640) target = $region20
        $region19: #{tpu_custom_call.1} parent=11 // pred_region
          _
        $region20: #{tpu_custom_call.1} parent=11 // pred_fallthru
          _
        // Predicated region
        $region21: #{tpu_custom_call.1} parent=11 // pred_check
          %p643 = pneg %p155
        $region22: #{tpu_custom_call.1} parent=11 // pred_check_branch
          %645 = sbr.rel (%p643) target = $region24
        $region23: #{tpu_custom_call.1} parent=11 // pred_region
          _
        $region24: #{tpu_custom_call.1} parent=11 // pred_fallthru
          _
        // Predicated region
        $region25: #{tpu_custom_call.1} parent=11 // pred_check
          %p646 = pneg %p176
        $region26: #{tpu_custom_call.1} parent=11 // pred_check_branch
          %648 = sbr.rel (%p646) target = $region28
        $region27: #{tpu_custom_call.1} parent=11 // pred_region
          %650 = vsyncadd [#allocation4], 0
          %s652 = sshll.u32 %s5, 4
          %s653 = int_to_ptr.hbm [resolvable:$true] %s652
          %s654 = sshll.u32 [#allocation3], 4
          %s655 = int_to_ptr.vmem [resolvable:$true] %s654
          %657 = dma.hbm_to_vmem [thread:$0]  %s653, 16, %s655, [#allocation4]
        $region28: #{tpu_custom_call.1} parent=11 // pred_fallthru
          _
        // Predicated region
        $region29: #{tpu_custom_call.1} parent=11 // pred_check
          %p658 = pneg %p197
        $region30: #{tpu_custom_call.1} parent=11 // pred_check_branch
          %660 = sbr.rel (%p658) target = $region32
        $region31: #{tpu_custom_call.1} parent=11 // pred_region
          _
        $region32: #{tpu_custom_call.1} parent=11 // pred_fallthru
          _
        // Predicated region
        $region33: #{tpu_custom_call.1} parent=11 // pred_check
          %p661 = pneg %p218
        $region34: #{tpu_custom_call.1} parent=11 // pred_check_branch
          %663 = sbr.rel (%p661) target = $region36
        $region35: #{tpu_custom_call.1} parent=11 // pred_region
          %665 = vsyncadd [#allocation6], 0
          %s667 = sshll.u32 %s7, 4
          %s668 = int_to_ptr.hbm [resolvable:$true] %s667
          %s669 = sshll.u32 [#allocation5], 4
          %s670 = int_to_ptr.vmem [resolvable:$true] %s669
          %672 = dma.hbm_to_vmem [thread:$0]  %s668, 16, %s670, [#allocation6]
        $region36: #{tpu_custom_call.1} parent=11 // pred_fallthru
          _
        // Predicated region
        $region37: #{tpu_custom_call.1} parent=11 // pred_check
          %p673 = pneg %p239
        $region38: #{tpu_custom_call.1} parent=11 // pred_check_branch
          %675 = sbr.rel (%p673) target = $region40
        $region39: #{tpu_custom_call.1} parent=11 // pred_region
          _
        $region40: #{tpu_custom_call.1} parent=11 // pred_fallthru
          _
        // Predicated region
        $region41: #{tpu_custom_call.1} parent=11 // pred_check
          %p676 = pneg %p260
        $region42: #{tpu_custom_call.1} parent=11 // pred_check_branch
          %678 = sbr.rel (%p676) target = $region44
        $region43: #{tpu_custom_call.1} parent=11 // pred_region
          %680 = vsyncadd [#allocation6], 0
          %s682 = sshll.u32 %s9, 4
          %s683 = int_to_ptr.hbm [resolvable:$true] %s682
          %s684 = sshll.u32 [#allocation7], 4
          %s685 = int_to_ptr.vmem [resolvable:$true] %s684
          %687 = dma.hbm_to_vmem [thread:$0]  %s683, 16, %s685, [#allocation6]
        $region44: #{tpu_custom_call.1} parent=11 // pred_fallthru
          _
        // Predicated region
        $region45: #{tpu_custom_call.1} parent=11 // pred_check
          %p688 = pneg %p281
        $region46: #{tpu_custom_call.1} parent=11 // pred_check_branch
          %690 = sbr.rel (%p688) target = $region48
        $region47: #{tpu_custom_call.1} parent=11 // pred_region
          %692 = vsyncadd [#allocation9], 0
          %s693 = sshll.u32 %s10, 4
          %s694 = int_to_ptr.hbm [resolvable:$true] %s693
          %s695 = sshll.u32 [#allocation8], 4
          %s696 = int_to_ptr.vmem [resolvable:$true] %s695
          %701 = dma.hbm_to_vmem [thread:$0]  %s694, 256, %s696, [#allocation9], 128, 128, 8
        $region48: #{tpu_custom_call.1} parent=11 // pred_fallthru
          _
        // Predicated region
        $region49: #{tpu_custom_call.1} parent=11 // pred_check
          %p702 = pneg %p302
        $region50: #{tpu_custom_call.1} parent=11 // pred_check_branch
          %704 = sbr.rel (%p702) target = $region52
        $region51: #{tpu_custom_call.1} parent=11 // pred_region
          %706 = vsyncadd [#allocation9], 0
          %s708 = sshll.u32 %s11, 4
          %s709 = int_to_ptr.hbm [resolvable:$true] %s708
          %s710 = sshll.u32 [#allocation10], 4
          %s711 = int_to_ptr.vmem [resolvable:$true] %s710
          %713 = dma.hbm_to_vmem [thread:$0]  %s709, 16, %s711, [#allocation9]
        $region52: #{tpu_custom_call.1} parent=11 // pred_fallthru
          _
        // Predicated region
        $region53: #{tpu_custom_call.1} parent=11 // pred_check
          %p714 = pneg %p323
        $region54: #{tpu_custom_call.1} parent=11 // pred_check_branch
          %716 = sbr.rel (%p714) target = $region56
        $region55: #{tpu_custom_call.1} parent=11 // pred_region
          %718 = vsyncadd [#allocation12], 0
          %s719 = sshll.u32 %s12, 4
          %s720 = int_to_ptr.hbm [resolvable:$true] %s719
          %s721 = sshll.u32 [#allocation11], 4
          %s722 = int_to_ptr.vmem [resolvable:$true] %s721
          %727 = dma.hbm_to_vmem [thread:$0]  %s720, 256, %s722, [#allocation12], 128, 128, 8
        $region56: #{tpu_custom_call.1} parent=11 // pred_fallthru
          _
        // Predicated region
        $region57: #{tpu_custom_call.1} parent=11 // pred_check
          %p728 = pneg %p344
        $region58: #{tpu_custom_call.1} parent=11 // pred_check_branch
          %730 = sbr.rel (%p728) target = $region60
        $region59: #{tpu_custom_call.1} parent=11 // pred_region
          %732 = vsyncadd [#allocation12], 0
          %s734 = sshll.u32 %s13, 4
          %s735 = int_to_ptr.hbm [resolvable:$true] %s734
          %s736 = sshll.u32 [#allocation13], 4
          %s737 = int_to_ptr.vmem [resolvable:$true] %s736
          %739 = dma.hbm_to_vmem [thread:$0]  %s735, 16, %s737, [#allocation12]
        $region60: #{tpu_custom_call.1} parent=11 // pred_fallthru
          _
        // Predicated region
        $region61: #{tpu_custom_call.1} parent=11 // pred_check
          %p740 = pneg %p365
        $region62: #{tpu_custom_call.1} parent=11 // pred_check_branch
          %742 = sbr.rel (%p740) target = $region64
        $region63: #{tpu_custom_call.1} parent=11 // pred_region
          _
        $region64: #{tpu_custom_call.1} parent=11 // pred_fallthru
          _
        // Predicated region
        $region65: #{tpu_custom_call.1} parent=11 // pred_check
          %p743 = pneg %p386
        $region66: #{tpu_custom_call.1} parent=11 // pred_check_branch
          %745 = sbr.rel (%p743) target = $region68
        $region67: #{tpu_custom_call.1} parent=11 // pred_region
          %747 = vsyncadd [#allocation15], 0
          %s749 = sshll.u32 %s15, 4
          %s750 = int_to_ptr.hbm [resolvable:$true] %s749
          %s751 = sshll.u32 [#allocation14], 4
          %s752 = int_to_ptr.vmem [resolvable:$true] %s751
          %754 = dma.hbm_to_vmem [thread:$0]  %s750, 16, %s752, [#allocation15]
        $region68: #{tpu_custom_call.1} parent=11 // pred_fallthru
          _
        // Predicated region
        $region69: #{tpu_custom_call.1} parent=11 // pred_check
          %p755 = pneg %p407
        $region70: #{tpu_custom_call.1} parent=11 // pred_check_branch
          %757 = sbr.rel (%p755) target = $region72
        $region71: #{tpu_custom_call.1} parent=11 // pred_region
          _
        $region72: #{tpu_custom_call.1} parent=11 // pred_fallthru
          _
        // Predicated region
        $region73: #{tpu_custom_call.1} parent=11 // pred_check
          %p758 = pneg %p428
        $region74: #{tpu_custom_call.1} parent=11 // pred_check_branch
          %760 = sbr.rel (%p758) target = $region76
        $region75: #{tpu_custom_call.1} parent=11 // pred_region
          %762 = vsyncadd [#allocation15], 0
          %s764 = sshll.u32 %s17, 4
          %s765 = int_to_ptr.hbm [resolvable:$true] %s764
          %s766 = sshll.u32 [#allocation16], 4
          %s767 = int_to_ptr.vmem [resolvable:$true] %s766
          %769 = dma.hbm_to_vmem [thread:$0]  %s765, 16, %s767, [#allocation15]
        $region76: #{tpu_custom_call.1} parent=11 // pred_fallthru
          _
        // Predicated region
        $region77: #{tpu_custom_call.1} parent=11 // pred_check
          %p770 = pneg %p449
        $region78: #{tpu_custom_call.1} parent=11 // pred_check_branch
          %772 = sbr.rel (%p770) target = $region80
        $region79: #{tpu_custom_call.1} parent=11 // pred_region
          %774 = vsyncadd [#allocation18], 0
          %s775 = sshll.u32 %s18, 4
          %s776 = int_to_ptr.hbm [resolvable:$true] %s775
          %s777 = sshll.u32 [#allocation17], 4
          %s778 = int_to_ptr.vmem [resolvable:$true] %s777
          %783 = dma.hbm_to_vmem [thread:$0]  %s776, 256, %s778, [#allocation18], 128, 128, 8
        $region80: #{tpu_custom_call.1} parent=11 // pred_fallthru
          _
        // Predicated region
        $region81: #{tpu_custom_call.1} parent=11 // pred_check
          %p784 = pneg %p470
        $region82: #{tpu_custom_call.1} parent=11 // pred_check_branch
          %786 = sbr.rel (%p784) target = $region84
        $region83: #{tpu_custom_call.1} parent=11 // pred_region
          _
        $region84: #{tpu_custom_call.1} parent=11 // pred_fallthru
          _
        // Predicated region
        $region85: #{tpu_custom_call.1} parent=11 // pred_check
          %p787 = pneg %p491
        $region86: #{tpu_custom_call.1} parent=11 // pred_check_branch
          %789 = sbr.rel (%p787) target = $region88
        $region87: #{tpu_custom_call.1} parent=11 // pred_region
          %791 = vsyncadd [#allocation18], 0
          %s792 = sshll.u32 %s20, 4
          %s793 = int_to_ptr.hbm [resolvable:$true] %s792
          %s794 = sshll.u32 [#allocation19], 4
          %s795 = int_to_ptr.vmem [resolvable:$true] %s794
          %800 = dma.hbm_to_vmem [thread:$0]  %s793, 256, %s795, [#allocation18], 128, 128, 8
        $region88: #{tpu_custom_call.1} parent=11 // pred_fallthru
          _
        // Predicated region
        $region89: #{tpu_custom_call.1} parent=11 // pred_check
          %p801 = pneg %p512
        $region90: #{tpu_custom_call.1} parent=11 // pred_check_branch
          %803 = sbr.rel (%p801) target = $region92
        $region91: #{tpu_custom_call.1} parent=11 // pred_region
          _
        $region92: #{tpu_custom_call.1} parent=11 // pred_fallthru
          _
        // Predicated region
        $region93: #{tpu_custom_call.1} parent=11 // pred_check
          %p804 = pneg %p533
        $region94: #{tpu_custom_call.1} parent=11 // pred_check_branch
          %806 = sbr.rel (%p804) target = $region96
        $region95: #{tpu_custom_call.1} parent=11 // pred_region
          _
        $region96: #{tpu_custom_call.1} parent=11 // pred_fallthru
          _
        // Predicated region
        $region97: #{tpu_custom_call.1} parent=11 // pred_check
          %p807 = pneg %p554
        $region98: #{tpu_custom_call.1} parent=11 // pred_check_branch
          %809 = sbr.rel (%p807) target = $region100
        $region99: #{tpu_custom_call.1} parent=11 // pred_region
          _
        $region100: #{tpu_custom_call.1} parent=11 // pred_fallthru
          _
        // Predicated region
        $region101: #{tpu_custom_call.1} parent=11 // pred_check
          %p810 = pneg %p575
        $region102: #{tpu_custom_call.1} parent=11 // pred_check_branch
          %812 = sbr.rel (%p810) target = $region104
        $region103: #{tpu_custom_call.1} parent=11 // pred_region
          _
        $region104: #{tpu_custom_call.1} parent=11 // pred_fallthru
          _
        // Predicated region
        $region105: #{tpu_custom_call.1} parent=11 // pred_check
          %p813 = pneg %p596
        $region106: #{tpu_custom_call.1} parent=11 // pred_check_branch
          %815 = sbr.rel (%p813) target = $region108
        $region107: #{tpu_custom_call.1} parent=11 // pred_region
          _
        $region108: #{tpu_custom_call.1} parent=11 // pred_fallthru
          _
      $region12: #{tpu_custom_call.1} parent=5 // pred_fallthru
        _
      %p816 = scmp.lt.s32.totalorder %s40, 2
      // Predicated region
      $region109: #{tpu_custom_call.1} parent=5 // pred_check
        %p817 = pneg %p816
      $region110: #{tpu_custom_call.1} parent=5 // pred_check_branch
        %819 = sbr.rel (%p817) target = $region112
      $region111: #{tpu_custom_call.1} parent=5 // pred_region
        // Predicated region
        $region113: #{tpu_custom_call.1} parent=111 // pred_check
          %p820 = pneg %p60
        $region114: #{tpu_custom_call.1} parent=111 // pred_check_branch
          %822 = sbr.rel (%p820) target = $region116
        $region115: #{tpu_custom_call.1} parent=111 // pred_region
          %p823 = scmp.lt.s32.totalorder %s40, 1
          %s824 = scalar_select %p823, %s40, 1
          %s825 = smul.addr %s824, 2
          %s826 = smul.addr %s825, 8
          %s827 = scalar_lea.vmem %s0, %s826
        $region116: #{tpu_custom_call.1} parent=111 // pred_fallthru
          _
        // Predicated region
        $region117: #{tpu_custom_call.1} parent=111 // pred_check
          %p828 = pneg %p86
        $region118: #{tpu_custom_call.1} parent=111 // pred_check_branch
          %830 = sbr.rel (%p828) target = $region120
        $region119: #{tpu_custom_call.1} parent=111 // pred_region
          %p831 = scmp.lt.s32.totalorder %s40, 1
          %s832 = scalar_select %p831, %s40, 1
          %s833 = smul.addr %s832, 3
          %s834 = smul.addr %s833, 4
          %s835 = scalar_lea.vmem %s1, %s834
        $region120: #{tpu_custom_call.1} parent=111 // pred_fallthru
          _
      $region112: #{tpu_custom_call.1} parent=5 // pred_fallthru
        _
      %p836 = scmp.le.s32.totalorder 1, %s40
      %p837 = scmp.lt.s32.totalorder %s40, 3
      %p838 = pnand %p836, %p837
      %p839 = pneg %p838
      // Predicated region
      $region121: #{tpu_custom_call.1} parent=5 // pred_check
        _
      $region122: #{tpu_custom_call.1} parent=5 // pred_check_branch
        %841 = sbr.rel (%p838) target = $region124
      $region123: #{tpu_custom_call.1} parent=5 // pred_region
        %s842 = ssub.s32 %s40, 1
        // Predicated region
        $region125: #{tpu_custom_call.1} parent=123 // pred_check
          %p843 = pneg %p176
        $region126: #{tpu_custom_call.1} parent=123 // pred_check_branch
          %845 = sbr.rel (%p843) target = $region128
        $region127: #{tpu_custom_call.1} parent=123 // pred_region
          %847 = dma.done [#allocation4], 16
        $region128: #{tpu_custom_call.1} parent=123 // pred_fallthru
          _
        // Predicated region
        $region129: #{tpu_custom_call.1} parent=123 // pred_check
          %p848 = pneg %p218
        $region130: #{tpu_custom_call.1} parent=123 // pred_check_branch
          %850 = sbr.rel (%p848) target = $region132
        $region131: #{tpu_custom_call.1} parent=123 // pred_region
          %852 = dma.done [#allocation6], 16
        $region132: #{tpu_custom_call.1} parent=123 // pred_fallthru
          _
        // Predicated region
        $region133: #{tpu_custom_call.1} parent=123 // pred_check
          %p853 = pneg %p260
        $region134: #{tpu_custom_call.1} parent=123 // pred_check_branch
          %855 = sbr.rel (%p853) target = $region136
        $region135: #{tpu_custom_call.1} parent=123 // pred_region
          %857 = dma.done [#allocation6], 16
        $region136: #{tpu_custom_call.1} parent=123 // pred_fallthru
          _
        // Predicated region
        $region137: #{tpu_custom_call.1} parent=123 // pred_check
          %p858 = pneg %p281
        $region138: #{tpu_custom_call.1} parent=123 // pred_check_branch
          %860 = sbr.rel (%p858) target = $region140
        $region139: #{tpu_custom_call.1} parent=123 // pred_region
          %862 = dma.done [#allocation9], 256
        $region140: #{tpu_custom_call.1} parent=123 // pred_fallthru
          _
        // Predicated region
        $region141: #{tpu_custom_call.1} parent=123 // pred_check
          %p863 = pneg %p302
        $region142: #{tpu_custom_call.1} parent=123 // pred_check_branch
          %865 = sbr.rel (%p863) target = $region144
        $region143: #{tpu_custom_call.1} parent=123 // pred_region
          %867 = dma.done [#allocation9], 16
        $region144: #{tpu_custom_call.1} parent=123 // pred_fallthru
          _
        // Predicated region
        $region145: #{tpu_custom_call.1} parent=123 // pred_check
          %p868 = pneg %p323
        $region146: #{tpu_custom_call.1} parent=123 // pred_check_branch
          %870 = sbr.rel (%p868) target = $region148
        $region147: #{tpu_custom_call.1} parent=123 // pred_region
          %872 = dma.done [#allocation12], 256
        $region148: #{tpu_custom_call.1} parent=123 // pred_fallthru
          _
        // Predicated region
        $region149: #{tpu_custom_call.1} parent=123 // pred_check
          %p873 = pneg %p344
        $region150: #{tpu_custom_call.1} parent=123 // pred_check_branch
          %875 = sbr.rel (%p873) target = $region152
        $region151: #{tpu_custom_call.1} parent=123 // pred_region
          %877 = dma.done [#allocation12], 16
        $region152: #{tpu_custom_call.1} parent=123 // pred_fallthru
          _
        // Predicated region
        $region153: #{tpu_custom_call.1} parent=123 // pred_check
          %p878 = pneg %p386
        $region154: #{tpu_custom_call.1} parent=123 // pred_check_branch
          %880 = sbr.rel (%p878) target = $region156
        $region155: #{tpu_custom_call.1} parent=123 // pred_region
          %882 = dma.done [#allocation15], 16
        $region156: #{tpu_custom_call.1} parent=123 // pred_fallthru
          _
        // Predicated region
        $region157: #{tpu_custom_call.1} parent=123 // pred_check
          %p883 = pneg %p428
        $region158: #{tpu_custom_call.1} parent=123 // pred_check_branch
          %885 = sbr.rel (%p883) target = $region160
        $region159: #{tpu_custom_call.1} parent=123 // pred_region
          %887 = dma.done [#allocation15], 16
        $region160: #{tpu_custom_call.1} parent=123 // pred_fallthru
          _
        // Predicated region
        $region161: #{tpu_custom_call.1} parent=123 // pred_check
          %p888 = pneg %p449
        $region162: #{tpu_custom_call.1} parent=123 // pred_check_branch
          %890 = sbr.rel (%p888) target = $region164
        $region163: #{tpu_custom_call.1} parent=123 // pred_region
          %892 = dma.done [#allocation18], 256
        $region164: #{tpu_custom_call.1} parent=123 // pred_fallthru
          _
        // Predicated region
        $region165: #{tpu_custom_call.1} parent=123 // pred_check
          %p893 = pneg %p491
        $region166: #{tpu_custom_call.1} parent=123 // pred_check_branch
          %895 = sbr.rel (%p893) target = $region168
        $region167: #{tpu_custom_call.1} parent=123 // pred_region
          %897 = dma.done [#allocation18], 256
        $region168: #{tpu_custom_call.1} parent=123 // pred_fallthru
          _
        %p898 = scmp.lt.s32.totalorder %s45, 1
        %s899 = scalar_select %p898, %s45, 1
        %s900 = smul.addr %s899, 2
        %s901 = smul.addr %s900, 8
        %s902 = scalar_lea.vmem %s0, %s901
        %p903 = pneg %p66
        %p904 = pneg %p63
        %p905 = scmp.lt.s32.totalorder %s45, 1
        %s906 = scalar_select %p905, %s45, 1
        %s907 = smul.addr %s906, 3
        %s908 = smul.addr %s907, 4
        %s909 = scalar_lea.vmem %s1, %s908
        %p910 = pneg %p92
        %p911 = pneg %p89
        %p912 = pneg %p113
        %p913 = pneg %p110
        %p914 = pneg %p134
        %p915 = pneg %p131
        %p916 = pneg %p155
        %p917 = pneg %p152
        %p918 = pneg %p176
        %p919 = pneg %p173
        %p920 = pneg %p197
        %p921 = pneg %p194
        %p922 = pneg %p218
        %p923 = pneg %p215
        %p924 = pneg %p239
        %p925 = pneg %p236
        %p926 = pneg %p260
        %p927 = pneg %p257
        %p928 = pneg %p281
        %p929 = pneg %p278
        %p930 = pneg %p302
        %p931 = pneg %p299
        %p932 = pneg %p323
        %p933 = pneg %p320
        %p934 = pneg %p344
        %p935 = pneg %p341
        %p936 = pneg %p365
        %p937 = pneg %p362
        %p938 = pneg %p386
        %p939 = pneg %p383
        %p940 = pneg %p407
        %p941 = pneg %p404
        %p942 = pneg %p428
        %p943 = pneg %p425
        %p944 = pneg %p449
        %p945 = pneg %p446
        %p946 = pneg %p470
        %p947 = pneg %p467
        %p948 = pneg %p491
        %p949 = pneg %p488
        %p950 = pneg %p512
        %p951 = pneg %p509
        %p952 = pneg %p533
        %p953 = pneg %p530
        %p954 = pneg %p554
        %p955 = pneg %p551
        %p956 = pneg %p575
        %p957 = pneg %p572
        %p958 = pneg %p596
        %p959 = pneg %p593
        %p960 = pneg %p622
        %p961 = pneg %p619
        %p962 = scmp.lt.s32.totalorder %s45, 1
        %s963 = scalar_select %p962, %s45, 1
        %s964 = scalar_lea.vmem %s26, %s963
        %p965 = scmp.lt.s32.totalorder %s45, 1
        %s966 = scalar_select %p965, %s45, 1
        %s967 = smul.addr %s966, 2
        %s968 = smul.addr %s967, 8
        %s969 = scalar_lea.vmem %s0, %s968
        %p970 = scmp.lt.s32.totalorder %s45, 1
        %s971 = scalar_select %p970, %s45, 1
        %s972 = smul.addr %s971, 3
        %s973 = smul.addr %s972, 4
        %s974 = scalar_lea.vmem %s1, %s973
        %p975 = scmp.lt.s32.totalorder %s45, 1
        %s976 = scalar_select %p975, %s45, 1
        %s977 = scalar_lea.vmem %s26, %s976
        %v979 = vld [vmem:[%s974] sm:$0xf]
        %v980 = vld [vmem:[%s974 + $0x4] sm:$0xf]
        %v981 = vld [vmem:[%s974 + $0x8] sm:$0xf]
        %v982 = vunpack.c.l.bf16 %v979
        %v983 = vunpack.c.l.bf16 %v980
        %v984 = vunpack.c.l.bf16 %v981
        %v985 = vpack.c.bf16 %v983, %v982
        %vm986 = vcmask 130048
        %v988 = vsel %vm986, %v985, 0
        %990 = vmatpush.bf16.msra.mxu0 0
        %991 = vmatpush.bf16.msra.mxu0 0
        %992 = vmatpush.bf16.msra.mxu0 0
        %993 = vmatpush.bf16.msra.mxu0 0
        %994 = vmatpush.bf16.msra.mxu0 0
        %995 = vmatpush.bf16.msra.mxu0 0
        %996 = vmatpush.bf16.msra.mxu0 0
        %997 = vmatpush.bf16.msra.mxu0 %v985
        %998 = vmatmul.bf16.gmra.mxu0 %v988
        %v999 = vpop.f32.mrf.mxu0
        %v1000 = vadd.f32 0.0, %v999
        %v1001 = vpop.f32.mrf.mxu0
        %v1002 = vadd.f32 0.0, %v1001
        %1003 = vdwg.mxu0
        %v1004 = vsel %vm986, %v982, 0.0
        %1005 = vadd.xlane.f32.xlu0 %v1004
        %v1006 = vpop.xlane.xlu0 %1005
        %v1007 = vsel %vm986, %v983, 0.0
        %1008 = vadd.xlane.f32.xlu0 %v1007
        %v1009 = vpop.xlane.xlu0 %1008
        %v1010 = vmul.f32 %v982, %v982
        %v1011 = vmul.f32 %v983, %v983
        %v1012 = vsel %vm986, %v1010, 0.0
        %1013 = vadd.xlane.f32.xlu0 %v1012
        %v1014 = vpop.xlane.xlu0 %1013
        %v1015 = vsel %vm986, %v1011, 0.0
        %1016 = vadd.xlane.f32.xlu0 %v1015
        %v1017 = vpop.xlane.xlu0 %1016
        %v1018 = vmul.f32 %v1000, %v982
        %v1019 = vmul.f32 %v1002, %v983
        %v1020 = vsel %vm986, %v1018, 0.0
        %1021 = vadd.xlane.f32.xlu0 %v1020
        %v1022 = vpop.xlane.xlu0 %1021
        %v1023 = vsel %vm986, %v1019, 0.0
        %1024 = vadd.xlane.f32.xlu0 %v1023
        %v1025 = vpop.xlane.xlu0 %1024
        %v1026 = vmul.f32 %v1000, %v1000
        %v1027 = vmul.f32 %v1002, %v1002
        %v1028 = vsel %vm986, %v1026, 0.0
        %1029 = vadd.xlane.f32.xlu0 %v1028
        %v1030 = vpop.xlane.xlu0 %1029
        %v1031 = vsel %vm986, %v1027, 0.0
        %1032 = vadd.xlane.f32.xlu0 %v1031
        %v1033 = vpop.xlane.xlu0 %1032
        %vm1034 = vcmask 7168
        %v1035 = vsel %vm1034, %v1006, %v1014
        %v1036 = vsel %vm1034, %v1009, %v1017
        %vm1037 = vcmask 15360
        %v1038 = vsel %vm1037, %v1035, %v1022
        %v1039 = vsel %vm1037, %v1036, %v1025
        %vm1040 = vcmask 23552
        %v1041 = vsel %vm1040, %v1038, %v1030
        %v1042 = vsel %vm1040, %v1039, %v1033
        %v1043 = vmul.f32 %v1041, 0.0625
        %v1044 = vmul.f32 %v1042, 0.0625
        %v1045 = vld [vmem:[%s969] sm:$0xff]
        %v1046 = vld [vmem:[%s969 + $0x8] sm:$0xff]
        %1049 = vrot.lane.b32.xlu0 %v1043, 4
        %v1050 = vpop.permute.xlu0 %1049
        %1051 = vrot.lane.b32.xlu0 %v1044, 4
        %v1052 = vpop.permute.xlu0 %1051
        %vm1055 = vcmask 31744
        %v1056 = vsel %vm1055, %v1045, %v1050
        %v1057 = vsel %vm1055, %v1046, %v1052
        %v1058 = vlaneseq
        %v1059 = vshrl.u32 %v1058, 7
        %v1060 = vadd.s32 %v1059, 8
        %v1061 = vadd.s32 %v1059, 16
        %vm1062 = vcmp.eq.s32.totalorder %v1059, 16
        %vm1063 = vcmp.eq.s32.totalorder %v1060, 16
        %vm1064 = vcmp.eq.s32.totalorder %v1061, 16
        %v1065 = vsel %vm1062, 1, 0
        %v1066 = vsel %vm1063, 1, 0
        %v1067 = vsel %vm1064, 1, 0
        %v1068 = vcvt.s32.f32 %v1065
        %v1069 = vcvt.s32.f32 %v1066
        %v1070 = vcvt.s32.f32 %v1067
        %vm1071 = vcmask 64512
        %v1072 = vsel %vm1071, %v1056, %v1068
        %v1073 = vsel %vm1071, %v1057, %v1069
        %v1074 = vsel %vm1071, 0.0, %v1070
        %vm1075 = vcmp.lt.s32.totalorder %v1059, 17
        %vm1076 = vcmp.lt.s32.totalorder %v1060, 17
        %vm1077 = vcmp.lt.s32.totalorder %v1061, 17
        %v1078 = vsel %vm1075, 1, 0
        %v1079 = vsel %vm1076, 1, 0
        %v1080 = vsel %vm1077, 1, 0
        %v1081 = vcvt.s32.f32 %v1078
        %v1082 = vcvt.s32.f32 %v1079
        %v1083 = vcvt.s32.f32 %v1080
        %vm1084 = vcmask 195584
        %v1086 = vsel %vm1084, %v982, 0
        %v1089 = vsel %vm1084, %v983, 0
        %v1092 = vsel %vm1084, %v984, 0
        %1094 = vmatpush.msra.mxu0 0.0
        %1095 = vmatpush.msra.mxu0 0.0
        %1096 = vmatpush.msra.mxu0 0.0
        %1097 = vmatpush.msra.mxu0 0.0
        %1098 = vmatpush.msra.mxu0 0.0
        %1099 = vmatpush.msra.mxu0 0.0
        %1100 = vmatpush.msra.mxu0 0.0
        %1101 = vmatpush.msra.mxu0 0.0
        %1102 = vmatpush.msra.mxu0 0.0
        %1103 = vmatpush.msra.mxu0 0.0
        %1104 = vmatpush.msra.mxu0 0.0
        %1105 = vmatpush.msra.mxu0 0.0
        %1106 = vmatpush.msra.mxu0 0.0
        %1107 = vmatpush.msra.mxu0 %v1074
        %1108 = vmatpush.msra.mxu0 %v1073
        %1109 = vmatpush.msra.mxu0 %v1072
        %1110 = vmatmul.f32.gmra.mxu0 %v1086
        %v1111 = vpop.f32.mrf.mxu0
        %v1112 = vadd.f32 0.0, %v1111
        %1113 = vmatmul.f32.gmra.mxu0 %v1089
        %v1114 = vpop.f32.mrf.mxu0
        %v1115 = vadd.f32 0.0, %v1114
        %1116 = vmatmul.f32.gmra.mxu0 %v1092
        %v1117 = vpop.f32.mrf.mxu0
        %v1118 = vadd.f32 0.0, %v1117
        %1119 = vdwg.mxu0
        %v1120 = vadd.f32 %v1072, %v1112
        %v1121 = vadd.f32 %v1073, %v1115
        %v1122 = vadd.f32 %v1074, %v1118
        %v1123 = vld [vmem:[%s2] sm:$0xff]
        %v1124 = vld [vmem:[%s2 + $0x8] sm:$0x1]
        %v1125 = vld [vmem:[%s3] sm:$0x1]
        %v1127 = vperm.slane %v1125, 0
        %vm1129 = vcmask 72704
        %v1131 = vsel %vm1129, %v1120, 0
        %v1134 = vsel %vm1129, %v1121, 0
        %v1137 = vsel %vm1129, %v1122, 0
        %vm1139 = vcmask 1040384
        %v1141 = vsel %vm1139, %v1124, 0
        %1143 = vmatpush.msra.mxu0 0.0
        %1144 = vmatpush.msra.mxu0 0.0
        %1145 = vmatpush.msra.mxu0 0.0
        %1146 = vmatpush.msra.mxu0 0.0
        %1147 = vmatpush.msra.mxu0 0.0
        %1148 = vmatpush.msra.mxu0 0.0
        %1149 = vmatpush.msra.mxu0 0.0
        %1150 = vmatpush.msra.mxu0 0.0
        %1151 = vmatpush.msra.mxu0 0.0
        %1152 = vmatpush.msra.mxu0 0.0
        %1153 = vmatpush.msra.mxu0 0.0
        %1154 = vmatpush.msra.mxu0 0.0
        %1155 = vmatpush.msra.mxu0 0.0
        %1156 = vmatpush.msra.mxu0 0.0
        %1157 = vmatpush.msra.mxu0 %v1141
        %1158 = vmatpush.msra.mxu0 %v1123
        %1159 = vmatmul.f32.gmra.mxu0 %v1131
        %v1160 = vpop.f32.mrf.mxu0
        %v1161 = vadd.f32 %v1127, %v1160
        %1162 = vmatmul.f32.gmra.mxu0 %v1134
        %v1163 = vpop.f32.mrf.mxu0
        %v1164 = vadd.f32 %v1127, %v1163
        %1165 = vmatmul.f32.gmra.mxu0 %v1137
        %v1166 = vpop.f32.mrf.mxu0
        %v1167 = vadd.f32 %v1127, %v1166
        %1168 = vdwg.mxu0
        %v1169 = vmax.f32 %v1161, 0.0
        %v1170 = vmax.f32 %v1164, 0.0
        %v1171 = vmax.f32 %v1167, 0.0
        %v1172 = vld [vmem:[%s4] sm:$0xff]
        %v1173 = vld [vmem:[%s4 + $0x8] sm:$0xff]
        %v1174 = vld [vmem:[%s4 + $0x10] sm:$0xff]
        %v1175 = vld [vmem:[%s4 + $0x18] sm:$0xff]
        %v1176 = vld [vmem:[#allocation3] sm:$0x1]
        %v1178 = vperm.slane %v1176, 0
        %vm1180 = vcmask 261120
        %v1182 = vsel %vm1180, %v1169, 0
        %v1185 = vsel %vm1180, %v1170, 0
        %v1188 = vsel %vm1180, %v1171, 0
        %1190 = vmatpush.msra.mxu0 0.0
        %1191 = vmatpush.msra.mxu0 0.0
        %1192 = vmatpush.msra.mxu0 0.0
        %1193 = vmatpush.msra.mxu0 0.0
        %1194 = vmatpush.msra.mxu0 0.0
        %1195 = vmatpush.msra.mxu0 0.0
        %1196 = vmatpush.msra.mxu0 0.0
        %1197 = vmatpush.msra.mxu0 0.0
        %1198 = vmatpush.msra.mxu0 0.0
        %1199 = vmatpush.msra.mxu0 0.0
        %1200 = vmatpush.msra.mxu0 0.0
        %1201 = vmatpush.msra.mxu0 0.0
        %1202 = vmatpush.msra.mxu0 %v1175
        %1203 = vmatpush.msra.mxu0 %v1174
        %1204 = vmatpush.msra.mxu0 %v1173
        %1205 = vmatpush.msra.mxu0 %v1172
        %1206 = vmatmul.f32.gmra.mxu0 %v1182
        %v1207 = vpop.f32.mrf.mxu0
        %v1208 = vadd.f32 %v1178, %v1207
        %1209 = vmatmul.f32.gmra.mxu0 %v1185
        %v1210 = vpop.f32.mrf.mxu0
        %v1211 = vadd.f32 %v1178, %v1210
        %1212 = vmatmul.f32.gmra.mxu0 %v1188
        %v1213 = vpop.f32.mrf.mxu0
        %v1214 = vadd.f32 %v1178, %v1213
        %1215 = vdwg.mxu0
        %v1216 = vsel %vm1129, %v1072, 0.0
        %v1217 = vsel %vm1129, %v1073, 0.0
        %v1218 = vadd.f32 %v1216, %v1217
        %v1219 = vsel %vm1129, %v1074, 0.0
        %v1220 = vadd.f32 %v1218, %v1219
        %v1221 = vrot.slane %v1220, 4
        %v1222 = vadd.f32 %v1220, %v1221
        %v1223 = vrot.slane %v1222, 2
        %v1224 = vadd.f32 %v1222, %v1223
        %v1225 = vrot.slane %v1224, 1
        %v1226 = vadd.f32 %v1224, %v1225
        %v1227 = vld [vmem:[%s6] sm:$0xff]
        %v1228 = vld [vmem:[%s6 + $0x8] sm:$0x1]
        %v1229 = vld [vmem:[#allocation5] sm:$0x1]
        %v1231 = vsel %vm1129, %v1226, 0
        %v1234 = vsel %vm1139, %v1228, 0
        %1236 = vmatpush.msra.mxu0 0.0
        %1237 = vmatpush.msra.mxu0 0.0
        %1238 = vmatpush.msra.mxu0 0.0
        %1239 = vmatpush.msra.mxu0 0.0
        %1240 = vmatpush.msra.mxu0 0.0
        %1241 = vmatpush.msra.mxu0 0.0
        %1242 = vmatpush.msra.mxu0 0.0
        %1243 = vmatpush.msra.mxu0 0.0
        %1244 = vmatpush.msra.mxu0 0.0
        %1245 = vmatpush.msra.mxu0 0.0
        %1246 = vmatpush.msra.mxu0 0.0
        %1247 = vmatpush.msra.mxu0 0.0
        %1248 = vmatpush.msra.mxu0 0.0
        %1249 = vmatpush.msra.mxu0 0.0
        %1250 = vmatpush.msra.mxu0 %v1234
        %1251 = vmatpush.msra.mxu0 %v1227
        %1252 = vmatmul.f32.gmra.mxu0 %v1231
        %v1253 = vpop.f32.mrf.mxu0
        %v1254 = vadd.f32 %v1229, %v1253
        %1255 = vdwg.mxu0
        %v1256 = vperm.slane %v1254, 0
        %v1257 = vadd.f32 %v1208, %v1256
        %v1258 = vadd.f32 %v1211, %v1256
        %v1259 = vadd.f32 %v1214, %v1256
        %v1260 = vsel %vm986, %v1257, 0.0
        %1261 = vadd.xlane.f32.xlu0 %v1260
        %v1262 = vpop.xlane.xlu0 %1261
        %v1263 = vsel %vm986, %v1258, 0.0
        %1264 = vadd.xlane.f32.xlu0 %v1263
        %v1265 = vpop.xlane.xlu0 %1264
        %v1266 = vsel %vm986, %v1259, 0.0
        %1267 = vadd.xlane.f32.xlu0 %v1266
        %v1268 = vpop.xlane.xlu0 %1267
        %v1269 = vrcp.pop 16.0
        %v1270 = vmul.f32 16.0, %v1269
        %v1271 = vsub.f32 1.0, %v1270
        %v1272 = vmul.f32 %v1269, %v1271
        %v1273 = vadd.f32 %v1269, %v1272
        %vm1274 = vweird.f32 %v1269
        %v1275 = vsel %vm1274, %v1269, %v1273
        %v1276 = vmul.f32 %v1262, %v1275
        %v1277 = vmul.f32 %v1265, %v1275
        %v1278 = vmul.f32 %v1268, %v1275
        %v1279 = vsub.f32 %v1257, %v1276
        %v1280 = vsub.f32 %v1258, %v1277
        %v1281 = vsub.f32 %v1259, %v1278
        %v1282 = vmul.f32 %v1279, %v1279
        %v1283 = vmul.f32 %v1280, %v1280
        %v1284 = vmul.f32 %v1281, %v1281
        %v1285 = vsel %vm986, %v1282, 0.0
        %1286 = vadd.xlane.f32.xlu0 %v1285
        %v1287 = vpop.xlane.xlu0 %1286
        %v1288 = vsel %vm986, %v1283, 0.0
        %1289 = vadd.xlane.f32.xlu0 %v1288
        %v1290 = vpop.xlane.xlu0 %1289
        %v1291 = vsel %vm986, %v1284, 0.0
        %1292 = vadd.xlane.f32.xlu0 %v1291
        %v1293 = vpop.xlane.xlu0 %1292
        %v1294 = vmul.f32 %v1287, %v1275
        %v1295 = vmul.f32 %v1290, %v1275
        %v1296 = vmul.f32 %v1293, %v1275
        %v1297 = vadd.f32 %v1294, 1e-05
        %v1298 = vadd.f32 %v1295, 1e-05
        %v1299 = vadd.f32 %v1296, 1e-05
        %v1300 = vrsqrt.pop %v1297
        %v1301 = vmul.f32 %v1300, %v1297
        %v1302 = vmul.f32 %v1301, %v1300
        %v1303 = vmul.f32 0.5, %v1302
        %v1304 = vsub.f32 1.5, %v1303
        %v1305 = vmul.f32 %v1300, %v1304
        %vm1306 = vweird.f32 %v1297
        %vm1307 = vweird.f32 %v1300
        %vm1308 = vmor %vm1306, %vm1307
        %v1309 = vsel %vm1308, %v1300, %v1305
        %v1310 = vrsqrt.pop %v1298
        %v1311 = vmul.f32 %v1310, %v1298
        %v1312 = vmul.f32 %v1311, %v1310
        %v1313 = vmul.f32 0.5, %v1312
        %v1314 = vsub.f32 1.5, %v1313
        %v1315 = vmul.f32 %v1310, %v1314
        %vm1316 = vweird.f32 %v1298
        %vm1317 = vweird.f32 %v1310
        %vm1318 = vmor %vm1316, %vm1317
        %v1319 = vsel %vm1318, %v1310, %v1315
        %v1320 = vrsqrt.pop %v1299
        %v1321 = vmul.f32 %v1320, %v1299
        %v1322 = vmul.f32 %v1321, %v1320
        %v1323 = vmul.f32 0.5, %v1322
        %v1324 = vsub.f32 1.5, %v1323
        %v1325 = vmul.f32 %v1320, %v1324
        %vm1326 = vweird.f32 %v1299
        %vm1327 = vweird.f32 %v1320
        %vm1328 = vmor %vm1326, %vm1327
        %v1329 = vsel %vm1328, %v1320, %v1325
        %v1330 = vmul.f32 %v1279, %v1309
        %v1331 = vmul.f32 %v1280, %v1319
        %v1332 = vmul.f32 %v1281, %v1329
        %v1333 = vld [vmem:[%s8] sm:$0xff]
        %v1334 = vld [vmem:[%s8 + $0x8] sm:$0x1]
        %v1335 = vld [vmem:[#allocation7] sm:$0x1]
        %v1337 = vperm.slane %v1335, 0
        %v1340 = vsel %vm1139, %v1334, 0
        %1342 = vmatpush.msra.mxu0 0.0
        %1343 = vmatpush.msra.mxu0 0.0
        %1344 = vmatpush.msra.mxu0 0.0
        %1345 = vmatpush.msra.mxu0 0.0
        %1346 = vmatpush.msra.mxu0 0.0
        %1347 = vmatpush.msra.mxu0 0.0
        %1348 = vmatpush.msra.mxu0 0.0
        %1349 = vmatpush.msra.mxu0 0.0
        %1350 = vmatpush.msra.mxu0 0.0
        %1351 = vmatpush.msra.mxu0 0.0
        %1352 = vmatpush.msra.mxu0 0.0
        %1353 = vmatpush.msra.mxu0 0.0
        %1354 = vmatpush.msra.mxu0 0.0
        %1355 = vmatpush.msra.mxu0 0.0
        %1356 = vmatpush.msra.mxu0 %v1340
        %1357 = vmatpush.msra.mxu0 %v1333
        %1358 = vmatmul.f32.gmra.mxu0 %v1131
        %v1359 = vpop.f32.mrf.mxu0
        %v1360 = vadd.f32 %v1337, %v1359
        %1361 = vmatmul.f32.gmra.mxu0 %v1134
        %v1362 = vpop.f32.mrf.mxu0
        %v1363 = vadd.f32 %v1337, %v1362
        %1364 = vmatmul.f32.gmra.mxu0 %v1137
        %v1365 = vpop.f32.mrf.mxu0
        %v1366 = vadd.f32 %v1337, %v1365
        %1367 = vdwg.mxu0
        %v1368 = vld [vmem:[#allocation8] sm:$0xff]
        %v1369 = vld [vmem:[#allocation8 + $0x8] sm:$0x1]
        %v1371 = vsel %vm1139, %v1369, 0
        %1373 = vmatpush.msra.mxu0 0.0
        %1374 = vmatpush.msra.mxu0 0.0
        %1375 = vmatpush.msra.mxu0 0.0
        %1376 = vmatpush.msra.mxu0 0.0
        %1377 = vmatpush.msra.mxu0 0.0
        %1378 = vmatpush.msra.mxu0 0.0
        %1379 = vmatpush.msra.mxu0 0.0
        %1380 = vmatpush.msra.mxu0 0.0
        %1381 = vmatpush.msra.mxu0 0.0
        %1382 = vmatpush.msra.mxu0 0.0
        %1383 = vmatpush.msra.mxu0 0.0
        %1384 = vmatpush.msra.mxu0 0.0
        %1385 = vmatpush.msra.mxu0 0.0
        %1386 = vmatpush.msra.mxu0 0.0
        %1387 = vmatpush.msra.mxu0 %v1371
        %1388 = vmatpush.msra.mxu0 %v1368
        %1389 = vmatmul.f32.gmra.mxu0 %v1231
        %v1390 = vpop.f32.mrf.mxu0
        %v1391 = vadd.f32 0.0, %v1390
        %1392 = vdwg.mxu0
        %v1393 = vperm.slane %v1391, 0
        %v1394 = vadd.f32 %v1360, %v1393
        %v1395 = vadd.f32 %v1363, %v1393
        %v1396 = vadd.f32 %v1366, %v1393
        %v1397 = vld [vmem:[#allocation10] sm:$0x1]
        %v1399 = vperm.slane %v1397, 0
        %v1401 = vadd.f32 %v1394, %v1399
        %v1402 = vadd.f32 %v1395, %v1399
        %v1403 = vadd.f32 %v1396, %v1399
        %v1404 = vadd.f32 %v1330, %v1401
        %v1405 = vadd.f32 %v1331, %v1402
        %v1406 = vadd.f32 %v1332, %v1403
        %v1407 = vmul.f32 %v1404, %v1081
        %v1408 = vmul.f32 %v1405, %v1082
        %v1409 = vmul.f32 %v1406, %v1083
        %1410 = vmatpush.msra.mxu0 0.0
        %1411 = vmatpush.msra.mxu0 0.0
        %1412 = vmatpush.msra.mxu0 0.0
        %1413 = vmatpush.msra.mxu0 0.0
        %1414 = vmatpush.msra.mxu0 0.0
        %1415 = vmatpush.msra.mxu0 0.0
        %1416 = vmatpush.msra.mxu0 0.0
        %1417 = vmatpush.msra.mxu0 0.0
        %1418 = vmatpush.msra.mxu0 0.0
        %1419 = vmatpush.msra.mxu0 0.0
        %1420 = vmatpush.msra.mxu0 0.0
        %1421 = vmatpush.msra.mxu0 0.0
        %1422 = vmatpush.msra.mxu0 0.0
        %1423 = vmatpush.msra.mxu0 %v1409
        %1424 = vmatpush.msra.mxu0 %v1408
        %1425 = vmatpush.msra.mxu0 %v1407
        %1426 = vmatmul.f32.gmra.mxu0 %v1086
        %v1427 = vpop.f32.mrf.mxu0
        %v1428 = vadd.f32 0.0, %v1427
        %1429 = vmatmul.f32.gmra.mxu0 %v1089
        %v1430 = vpop.f32.mrf.mxu0
        %v1431 = vadd.f32 0.0, %v1430
        %1432 = vmatmul.f32.gmra.mxu0 %v1092
        %v1433 = vpop.f32.mrf.mxu0
        %v1434 = vadd.f32 0.0, %v1433
        %1435 = vdwg.mxu0
        %v1436 = vadd.f32 %v1407, %v1428
        %v1437 = vadd.f32 %v1408, %v1431
        %v1438 = vadd.f32 %v1409, %v1434
        %v1439 = vld [vmem:[#allocation11] sm:$0xff]
        %v1440 = vld [vmem:[#allocation11 + $0x8] sm:$0xff]
        %v1441 = vld [vmem:[#allocation13] sm:$0x1]
        %v1443 = vperm.slane %v1441, 0
        %v1446 = vsel %vm986, %v1436, 0
        %v1449 = vsel %vm986, %v1437, 0
        %v1452 = vsel %vm986, %v1438, 0
        %1454 = vmatpush.msra.mxu0 0.0
        %1455 = vmatpush.msra.mxu0 0.0
        %1456 = vmatpush.msra.mxu0 0.0
        %1457 = vmatpush.msra.mxu0 0.0
        %1458 = vmatpush.msra.mxu0 0.0
        %1459 = vmatpush.msra.mxu0 0.0
        %1460 = vmatpush.msra.mxu0 0.0
        %1461 = vmatpush.msra.mxu0 0.0
        %1462 = vmatpush.msra.mxu0 0.0
        %1463 = vmatpush.msra.mxu0 0.0
        %1464 = vmatpush.msra.mxu0 0.0
        %1465 = vmatpush.msra.mxu0 0.0
        %1466 = vmatpush.msra.mxu0 0.0
        %1467 = vmatpush.msra.mxu0 0.0
        %1468 = vmatpush.msra.mxu0 %v1440
        %1469 = vmatpush.msra.mxu0 %v1439
        %1470 = vmatmul.f32.gmra.mxu0 %v1446
        %v1471 = vpop.f32.mrf.mxu0
        %v1472 = vadd.f32 %v1443, %v1471
        %1473 = vmatmul.f32.gmra.mxu0 %v1449
        %v1474 = vpop.f32.mrf.mxu0
        %v1475 = vadd.f32 %v1443, %v1474
        %1476 = vmatmul.f32.gmra.mxu0 %v1452
        %v1477 = vpop.f32.mrf.mxu0
        %v1478 = vadd.f32 %v1443, %v1477
        %1479 = vdwg.mxu0
        %v1480 = vmax.f32 %v1472, 0.0
        %v1481 = vmax.f32 %v1475, 0.0
        %v1482 = vmax.f32 %v1478, 0.0
        %v1483 = vld [vmem:[%s14] sm:$0xff]
        %v1484 = vld [vmem:[%s14 + $0x8] sm:$0xff]
        %v1485 = vld [vmem:[%s14 + $0x10] sm:$0xff]
        %v1486 = vld [vmem:[%s14 + $0x18] sm:$0xff]
        %v1487 = vld [vmem:[#allocation14] sm:$0x1]
        %v1489 = vperm.slane %v1487, 0
        %v1492 = vsel %vm1180, %v1480, 0
        %v1495 = vsel %vm1180, %v1481, 0
        %v1498 = vsel %vm1180, %v1482, 0
        %1500 = vmatpush.msra.mxu0 0.0
        %1501 = vmatpush.msra.mxu0 0.0
        %1502 = vmatpush.msra.mxu0 0.0
        %1503 = vmatpush.msra.mxu0 0.0
        %1504 = vmatpush.msra.mxu0 0.0
        %1505 = vmatpush.msra.mxu0 0.0
        %1506 = vmatpush.msra.mxu0 0.0
        %1507 = vmatpush.msra.mxu0 0.0
        %1508 = vmatpush.msra.mxu0 0.0
        %1509 = vmatpush.msra.mxu0 0.0
        %1510 = vmatpush.msra.mxu0 0.0
        %1511 = vmatpush.msra.mxu0 0.0
        %1512 = vmatpush.msra.mxu0 %v1486
        %1513 = vmatpush.msra.mxu0 %v1485
        %1514 = vmatpush.msra.mxu0 %v1484
        %1515 = vmatpush.msra.mxu0 %v1483
        %1516 = vmatmul.f32.gmra.mxu0 %v1492
        %v1517 = vpop.f32.mrf.mxu0
        %v1518 = vadd.f32 %v1489, %v1517
        %1519 = vmatmul.f32.gmra.mxu0 %v1495
        %v1520 = vpop.f32.mrf.mxu0
        %v1521 = vadd.f32 %v1489, %v1520
        %1522 = vmatmul.f32.gmra.mxu0 %v1498
        %v1523 = vpop.f32.mrf.mxu0
        %v1524 = vadd.f32 %v1489, %v1523
        %1525 = vdwg.mxu0
        %v1526 = vsel %vm986, %v1407, 0.0
        %v1527 = vsel %vm986, %v1408, 0.0
        %v1528 = vadd.f32 %v1526, %v1527
        %v1529 = vsel %vm986, %v1409, 0.0
        %v1530 = vadd.f32 %v1528, %v1529
        %v1531 = vrot.slane %v1530, 4
        %v1532 = vadd.f32 %v1530, %v1531
        %v1533 = vrot.slane %v1532, 2
        %v1534 = vadd.f32 %v1532, %v1533
        %v1535 = vrot.slane %v1534, 1
        %v1536 = vadd.f32 %v1534, %v1535
        %v1537 = vld [vmem:[%s16] sm:$0xff]
        %v1538 = vld [vmem:[%s16 + $0x8] sm:$0xff]
        %v1539 = vld [vmem:[#allocation16] sm:$0x1]
        %v1541 = vsel %vm986, %v1536, 0
        %1543 = vmatpush.msra.mxu0 0.0
        %1544 = vmatpush.msra.mxu0 0.0
        %1545 = vmatpush.msra.mxu0 0.0
        %1546 = vmatpush.msra.mxu0 0.0
        %1547 = vmatpush.msra.mxu0 0.0
        %1548 = vmatpush.msra.mxu0 0.0
        %1549 = vmatpush.msra.mxu0 0.0
        %1550 = vmatpush.msra.mxu0 0.0
        %1551 = vmatpush.msra.mxu0 0.0
        %1552 = vmatpush.msra.mxu0 0.0
        %1553 = vmatpush.msra.mxu0 0.0
        %1554 = vmatpush.msra.mxu0 0.0
        %1555 = vmatpush.msra.mxu0 0.0
        %1556 = vmatpush.msra.mxu0 0.0
        %1557 = vmatpush.msra.mxu0 %v1538
        %1558 = vmatpush.msra.mxu0 %v1537
        %1559 = vmatmul.f32.gmra.mxu0 %v1541
        %v1560 = vpop.f32.mrf.mxu0
        %v1561 = vadd.f32 %v1539, %v1560
        %1562 = vdwg.mxu0
        %v1563 = vperm.slane %v1561, 0
        %v1564 = vadd.f32 %v1518, %v1563
        %v1565 = vadd.f32 %v1521, %v1563
        %v1566 = vadd.f32 %v1524, %v1563
        %v1567 = vsel %vm986, %v1564, 0.0
        %1568 = vadd.xlane.f32.xlu0 %v1567
        %v1569 = vpop.xlane.xlu0 %1568
        %v1570 = vsel %vm986, %v1565, 0.0
        %1571 = vadd.xlane.f32.xlu0 %v1570
        %v1572 = vpop.xlane.xlu0 %1571
        %v1573 = vsel %vm986, %v1566, 0.0
        %1574 = vadd.xlane.f32.xlu0 %v1573
        %v1575 = vpop.xlane.xlu0 %1574
        %v1576 = vmul.f32 %v1569, %v1275
        %v1577 = vmul.f32 %v1572, %v1275
        %v1578 = vmul.f32 %v1575, %v1275
        %v1579 = vsub.f32 %v1564, %v1576
        %v1580 = vsub.f32 %v1565, %v1577
        %v1581 = vsub.f32 %v1566, %v1578
        %v1582 = vmul.f32 %v1579, %v1579
        %v1583 = vmul.f32 %v1580, %v1580
        %v1584 = vmul.f32 %v1581, %v1581
        %v1585 = vsel %vm986, %v1582, 0.0
        %1586 = vadd.xlane.f32.xlu0 %v1585
        %v1587 = vpop.xlane.xlu0 %1586
        %v1588 = vsel %vm986, %v1583, 0.0
        %1589 = vadd.xlane.f32.xlu0 %v1588
        %v1590 = vpop.xlane.xlu0 %1589
        %v1591 = vsel %vm986, %v1584, 0.0
        %1592 = vadd.xlane.f32.xlu0 %v1591
        %v1593 = vpop.xlane.xlu0 %1592
        %v1594 = vmul.f32 %v1587, %v1275
        %v1595 = vmul.f32 %v1590, %v1275
        %v1596 = vmul.f32 %v1593, %v1275
        %v1597 = vadd.f32 %v1594, 1e-05
        %v1598 = vadd.f32 %v1595, 1e-05
        %v1599 = vadd.f32 %v1596, 1e-05
        %v1600 = vrsqrt.pop %v1597
        %v1601 = vmul.f32 %v1600, %v1597
        %v1602 = vmul.f32 %v1601, %v1600
        %v1603 = vmul.f32 0.5, %v1602
        %v1604 = vsub.f32 1.5, %v1603
        %v1605 = vmul.f32 %v1600, %v1604
        %vm1606 = vweird.f32 %v1597
        %vm1607 = vweird.f32 %v1600
        %vm1608 = vmor %vm1606, %vm1607
        %v1609 = vsel %vm1608, %v1600, %v1605
        %v1610 = vrsqrt.pop %v1598
        %v1611 = vmul.f32 %v1610, %v1598
        %v1612 = vmul.f32 %v1611, %v1610
        %v1613 = vmul.f32 0.5, %v1612
        %v1614 = vsub.f32 1.5, %v1613
        %v1615 = vmul.f32 %v1610, %v1614
        %vm1616 = vweird.f32 %v1598
        %vm1617 = vweird.f32 %v1610
        %vm1618 = vmor %vm1616, %vm1617
        %v1619 = vsel %vm1618, %v1610, %v1615
        %v1620 = vrsqrt.pop %v1599
        %v1621 = vmul.f32 %v1620, %v1599
        %v1622 = vmul.f32 %v1621, %v1620
        %v1623 = vmul.f32 0.5, %v1622
        %v1624 = vsub.f32 1.5, %v1623
        %v1625 = vmul.f32 %v1620, %v1624
        %vm1626 = vweird.f32 %v1599
        %vm1627 = vweird.f32 %v1620
        %vm1628 = vmor %vm1626, %vm1627
        %v1629 = vsel %vm1628, %v1620, %v1625
        %v1630 = vmul.f32 %v1579, %v1609
        %v1631 = vmul.f32 %v1580, %v1619
        %v1632 = vmul.f32 %v1581, %v1629
        %v1633 = vadd.f32 %v1630, %v1407
        %v1634 = vadd.f32 %v1631, %v1408
        %v1635 = vadd.f32 %v1632, %v1409
        %v1636 = vmul.f32 %v1633, %v1081
        %v1637 = vmul.f32 %v1634, %v1082
        %v1638 = vmul.f32 %v1635, %v1083
        %1642 = vrot.lane.b32.xlu0 %v1636, 16
        %v1643 = vpop.permute.xlu0 %1642
        %1644 = vrot.lane.b32.xlu0 %v1637, 16
        %v1645 = vpop.permute.xlu0 %1644
        %1646 = vrot.lane.b32.xlu0 %v1638, 16
        %v1647 = vpop.permute.xlu0 %1646
        %v1651 = vsel %vm986, %v1407, %v1643
        %v1652 = vsel %vm986, %v1408, %v1645
        %v1653 = vsel %vm986, %v1409, %v1647
        %v1654 = vld [vmem:[%s22] sm:$0xff]
        %v1655 = vld [vmem:[%s22 + $0x8] sm:$0xff]
        %v1656 = vld [vmem:[%s22 + $0x10] sm:$0xff]
        %v1657 = vld [vmem:[%s22 + $0x18] sm:$0xff]
        %v1658 = vld [vmem:[%s23] sm:$0x1]
        %v1660 = vperm.slane %v1658, 0
        %v1663 = vsel %vm1180, %v1651, 0
        %v1666 = vsel %vm1180, %v1652, 0
        %v1669 = vsel %vm1180, %v1653, 0
        %1671 = vmatpush.msra.mxu0 0.0
        %1672 = vmatpush.msra.mxu0 0.0
        %1673 = vmatpush.msra.mxu0 0.0
        %1674 = vmatpush.msra.mxu0 0.0
        %1675 = vmatpush.msra.mxu0 0.0
        %1676 = vmatpush.msra.mxu0 0.0
        %1677 = vmatpush.msra.mxu0 0.0
        %1678 = vmatpush.msra.mxu0 0.0
        %1679 = vmatpush.msra.mxu0 0.0
        %1680 = vmatpush.msra.mxu0 0.0
        %1681 = vmatpush.msra.mxu0 0.0
        %1682 = vmatpush.msra.mxu0 0.0
        %1683 = vmatpush.msra.mxu0 %v1657
        %1684 = vmatpush.msra.mxu0 %v1656
        %1685 = vmatpush.msra.mxu0 %v1655
        %1686 = vmatpush.msra.mxu0 %v1654
        %1687 = vmatmul.f32.gmra.mxu0 %v1663
        %v1688 = vpop.f32.mrf.mxu0
        %v1689 = vadd.f32 %v1660, %v1688
        %1690 = vmatmul.f32.gmra.mxu0 %v1666
        %v1691 = vpop.f32.mrf.mxu0
        %v1692 = vadd.f32 %v1660, %v1691
        %1693 = vmatmul.f32.gmra.mxu0 %v1669
        %v1694 = vpop.f32.mrf.mxu0
        %v1695 = vadd.f32 %v1660, %v1694
        %1696 = vdwg.mxu0
        %v1697 = vmax.f32 %v1689, 0.0
        %v1698 = vmax.f32 %v1692, 0.0
        %v1699 = vmax.f32 %v1695, 0.0
        %v1700 = vmul.f32 %v1697, %v1081
        %v1701 = vmul.f32 %v1698, %v1082
        %v1702 = vmul.f32 %v1699, %v1083
        %vm1703 = vcmask 523264
        %v1704 = vsel %vm1703, %v1700, 0.0
        %v1705 = vsel %vm1703, %v1701, 0.0
        %v1706 = vadd.f32 %v1704, %v1705
        %v1707 = vsel %vm1703, %v1702, 0.0
        %v1708 = vadd.f32 %v1706, %v1707
        %v1709 = vrot.slane %v1708, 4
        %v1710 = vadd.f32 %v1708, %v1709
        %v1711 = vrot.slane %v1710, 2
        %v1712 = vadd.f32 %v1710, %v1711
        %v1713 = vrot.slane %v1712, 1
        %v1714 = vadd.f32 %v1712, %v1713
        %v1715 = vld [vmem:[%s24] sm:$0x1]
        %v1716 = vmul.f32 %v1714, %v1715
        %vm1717 = vcmask 516096
        %v1718 = vsel %vm1717, %v1716, 0.0
        %1719 = vadd.xlane.f32.xlu0 %v1718
        %v1720 = vpop.xlane.xlu0 %1719
        %v1721 = vld [vmem:[#allocation2] sm:$0x1]
        %v1722 = vadd.f32 %v1720, %v1721
        %vm1723 = vcmask 0
        %1724 = vst.msk [vmem:[%s977] sm:$0x1] %vm1723, %v1722
        %p1725 = scmp.lt.s32.totalorder %s45, 1
        %s1726 = scalar_select %p1725, %s45, 1
        %s1727 = scalar_lea.vmem %s26, %s1726
        // Predicated region
        $region169: #{tpu_custom_call.1} parent=123 // pred_check
          %p1728 = pneg %p619
        $region170: #{tpu_custom_call.1} parent=123 // pred_check_branch
          %1730 = sbr.rel (%p1728) target = $region172
        $region171: #{tpu_custom_call.1} parent=123 // pred_region
          _
        $region172: #{tpu_custom_call.1} parent=123 // pred_fallthru
          _
      $region124: #{tpu_custom_call.1} parent=5 // pred_fallthru
        _
      %p1731 = scmp.le.s32.totalorder 2, %s40
      // Predicated region
      $region173: #{tpu_custom_call.1} parent=5 // pred_check
        %p1732 = pneg %p1731
      $region174: #{tpu_custom_call.1} parent=5 // pred_check_branch
        %1734 = sbr.rel (%p1732) target = $region176
      $region175: #{tpu_custom_call.1} parent=5 // pred_region
        %s1735 = ssub.s32 %s40, 2
        // Predicated region
        $region177: #{tpu_custom_call.1} parent=175 // pred_check
          %p1736 = pneg %p625
        $region178: #{tpu_custom_call.1} parent=175 // pred_check_branch
          %1738 = sbr.rel (%p1736) target = $region180
        $region179: #{tpu_custom_call.1} parent=175 // pred_region
          %p1739 = scmp.lt.s32.totalorder %s46, 1
          %s1740 = scalar_select %p1739, %s46, 1
          %s1741 = scalar_lea.vmem %s26, %s1740
        $region180: #{tpu_custom_call.1} parent=175 // pred_fallthru
          _
      $region176: #{tpu_custom_call.1} parent=5 // pred_fallthru
        _
    $region6: #{tpu_custom_call.1} parent=1 // loop_footer
      %s44 = sadd.s32 1, %s40
    $region7: #{tpu_custom_call.1} parent=1 // loop_footer_branch
      %39 = sbr.rel target = $region3
    $region8: #{tpu_custom_call.1} parent=1 // loop_exit
      _
    %1742 = vsyncpa [#allocation4], 1
    %s1743 = scalar_lea.sflag [#allocation4], 1
    %1744 = vsyncpa %s1743, 1
    %1745 = vsyncpa [#allocation6], 1
    %1746 = vsyncpa [#allocation9], 1
    %1747 = vsyncpa [#allocation12], 1
    %1748 = vsyncpa [#allocation15], 1
    %1749 = vsyncpa [#allocation18], 1

</llo_original>
